<compile_context>
chip_gen: v5e
topology: v5e:2x2
jax: 0.10.0
libtpu: 0.0.40
codegen_flags: <defaults>
</compile_context>

<pallas_src>
import math
import numpy as np
import jax
import jax.numpy as jnp
from jax.experimental import pallas as pl
from jax.experimental.pallas import tpu as pltpu

# ---------------- problem sizes (small, consistent with the module) ----------------
B = 2      # batch
S = 8      # sequence length
D = 32     # d_model (== EncoderLayer.size)
H = 4      # attention heads
DH = D // H
DFF = 64   # feed-forward hidden
EPS = 1e-6
NEG_INF = -1e9
N = B * H  # merged (head, batch) attention batch dim, n = h*B + b

# ---------------- cost hints for the XLA scheduler ----------------
_FLOPS = (2 * (B * S) * D * (3 * D)       # fused QKV projection
          + 4 * N * S * S * DH            # attention scores + context
          + 2 * N * S * DH * D            # output projection
          + 4 * (B * S) * D * DFF)        # FFN (two matmuls)
_TRANSCENDENTALS = N * S * S + 2 * B * S  # softmax exps + LayerNorm sqrts
_BYTES = 4 * ((B * S) * D * 2 + N * S + 4 * D + D * 3 * D + 3 * D
              + N * DH * D + D + D * DFF + DFF + DFF * D + D)


# ---------------- in-kernel helpers ----------------
def _layernorm(x, gamma, beta):
    # x: (R, D), gamma/beta: (1, D).  torch .std() is unbiased (divide by N-1).
    # Per-row exact reciprocal + broadcast multiply (no full-tile divides).
    d = x.shape[-1]
    mean = jnp.sum(x, axis=-1, keepdims=True) * (1.0 / d)
    var = jnp.sum((x - mean) ** 2, axis=-1, keepdims=True) * (1.0 / (d - 1))
    inv = 1.0 / (jnp.sqrt(var) + EPS)          # (R, 1) exact per-row reciprocal
    return gamma * ((x - mean) * inv) + beta


def _softmax(x):
    m = jnp.max(x, axis=-1, keepdims=True)
    e = jnp.exp(x - m)
    inv = 1.0 / jnp.sum(e, axis=-1, keepdims=True)   # per-row exact reciprocal
    return e * inv


# ---------------- fused encoder-layer kernel (single invocation, no grid) ----------------
def encoder_layer_kernel(x_ref, bias_ref,
                         g1_ref, be1_ref,
                         wqkv_ref, bqkv_ref, wo_ref, bo_ref,
                         g2_ref, be2_ref,
                         w1_ref, b1_ref, w2_ref, b2_ref,
                         o_ref):
    x = x_ref[...]        # (B*S, D)
    bias = bias_ref[...]  # (N, 1, S) additive attention-mask bias (0 or -1e9)

    # ---- sublayer 0: x = x + MHA(LayerNorm(x), mask) ----
    xn = _layernorm(x, g1_ref[...], be1_ref[...])

    # Fused QKV projection: one (B*S, D) @ (D, 3D) matmul + one bias add.
    # 1/sqrt(DH) was folded into the Q weight/bias columns at init time.
    qkv = jnp.dot(xn, wqkv_ref[...], preferred_element_type=jnp.float32) + bqkv_ref[...]

    def split_heads(off):
        # Per-head lane slices stacked along a LEADING axis (cheap concat, no
        # lane shuffle), giving one merged batch dim n = h*B + b.
        return jnp.concatenate(
            [qkv[:, off + h * DH: off + (h + 1) * DH].reshape(B, S, DH)
             for h in range(H)],
            axis=0)                                              # (N, S, DH)

    q = split_heads(0)
    k = split_heads(D)
    v = split_heads(2 * D)

    # Two single batched contractions (instead of 2*H per-head matmuls) and
    # one batched softmax over all (head, batch) slices.
    s = jnp.einsum("nqd,nkd->nqk", q, k,
                   preferred_element_type=jnp.float32)           # (N, S, S)
    p = _softmax(s + bias)
    ctx = jnp.einsum("nqk,nkd->nqd", p, v,
                     preferred_element_type=jnp.float32)         # (N, S, DH)

    # Head merge + output projection WITHOUT a lane concatenate: contract each
    # head against its pre-tiled Wo slice, then reduce over the leading head
    # axis (pure VALU adds).
    part = jnp.einsum("nqd,ndo->nqo", ctx, wo_ref[...],
                      preferred_element_type=jnp.float32)        # (N, S, D)
    attn = jnp.sum(part.reshape(H, B * S, D), axis=0) + bo_ref[...]
    x = x + attn

    # ---- sublayer 1: x = x + FFN(LayerNorm(x)) ----
    xn2 = _layernorm(x, g2_ref[...], be2_ref[...])
    hid = jnp.maximum(
        jnp.dot(xn2, w1_ref[...], preferred_element_type=jnp.float32) + b1_ref[...],
        0.0)
    y = jnp.dot(hid, w2_ref[...], preferred_element_type=jnp.float32) + b2_ref[...]

    o_ref[...] = x + y


# ---------------- parameter prep (one-time constant folds, OUT of the call path) ----------------
def prepare_params(p):
    scale = 1.0 / math.sqrt(DH)
    # Fold the attention score scale into the Q columns (weights AND bias).
    wqkv = jnp.concatenate([p["wq"] * scale, p["wk"], p["wv"]], axis=1)   # (D, 3D)
    bqkv = jnp.concatenate([p["bq"] * scale, p["bk"], p["bv"]], axis=1)   # (1, 3D)
    # Pre-tile Wo per merged batch index n = h*B + b: wo_n[n] = wo[h*DH:(h+1)*DH, :].
    wo_n = jnp.repeat(p["wo"].reshape(H, DH, D), B, axis=0)               # (N, DH, D)
    return {
        "wqkv": wqkv, "bqkv": bqkv, "wo_n": wo_n, "bo": p["bo"],
        "ln1_g": p["ln1_g"], "ln1_b": p["ln1_b"],
        "ln2_g": p["ln2_g"], "ln2_b": p["ln2_b"],
        "w1": p["w1"], "b1": p["b1"], "w2": p["w2"], "b2": p["b2"],
    }


# ---------------- wrapper (jitted: single dispatch, mask->bias fuses in) ----------------
@jax.jit
def encoder_layer(x, mask, prep):
    """x: (B,S,D) f32, mask: (B,1,S) f32 (1 = keep, 0 = mask), prep: prepare_params(...)."""
    x2d = x.reshape(B * S, D)                                       # free leading-dim flatten
    bias = jnp.where(mask > 0, 0.0, NEG_INF).astype(jnp.float32)    # (B,1,S)
    bias_n = jnp.tile(bias, (H, 1, 1))                              # (N,1,S), n = h*B + b

    operands = (x2d, bias_n,
                prep["ln1_g"], prep["ln1_b"],
                prep["wqkv"], prep["bqkv"], prep["wo_n"], prep["bo"],
                prep["ln2_g"], prep["ln2_b"],
                prep["w1"], prep["b1"], prep["w2"], prep["b2"])

    # No grid: every operand is staged whole into VMEM once (explicitly).
    vmem = pl.BlockSpec(memory_space=pltpu.MemorySpace.VMEM)
    out2d = pl.pallas_call(
        encoder_layer_kernel,
        out_shape=jax.ShapeDtypeStruct((B * S, D), jnp.float32),
        in_specs=[vmem] * len(operands),
        out_specs=vmem,
        compiler_params=pltpu.CompilerParams(),
        cost_estimate=pl.CostEstimate(flops=_FLOPS,
                                      transcendentals=_TRANSCENDENTALS,
                                      bytes_accessed=_BYTES),
    )(*operands)

    return out2d.reshape(B, S, D)


# ---------------- pure-JAX reference (mirrors the PyTorch math) ----------------
def reference(x, mask, p):
    def ln(x, g, b):
        mean = jnp.mean(x, axis=-1, keepdims=True)
        var = jnp.sum((x - mean) ** 2, axis=-1, keepdims=True) / (x.shape[-1] - 1)
        return g * (x - mean) / (jnp.sqrt(var) + EPS) + b

    # attention sublayer
    xn = ln(x, p["ln1_g"], p["ln1_b"])
    q = xn @ p["wq"] + p["bq"]
    k = xn @ p["wk"] + p["bk"]
    v = xn @ p["wv"] + p["bv"]
    qh = q.reshape(B, S, H, DH).transpose(0, 2, 1, 3)
    kh = k.reshape(B, S, H, DH).transpose(0, 2, 1, 3)
    vh = v.reshape(B, S, H, DH).transpose(0, 2, 1, 3)
    scores = jnp.einsum("bhqd,bhkd->bhqk", qh, kh) / math.sqrt(DH)
    scores = jnp.where(mask[:, None, :, :] > 0, scores, NEG_INF)
    attn = jax.nn.softmax(scores, axis=-1)
    oh = jnp.einsum("bhqk,bhkd->bhqd", attn, vh)
    o = oh.transpose(0, 2, 1, 3).reshape(B, S, D) @ p["wo"] + p["bo"]
    x = x + o

    # ffn sublayer
    xn = ln(x, p["ln2_g"], p["ln2_b"])
    y = jnp.maximum(xn @ p["w1"] + p["b1"], 0.0) @ p["w2"] + p["b2"]
    return x + y


# ---------------- main ----------------
if __name__ == "__main__":
    key = jax.random.PRNGKey(0)
    ks = jax.random.split(key, 12)

    def w(k, shape, scale=0.02):
        return (scale * jax.random.normal(k, shape)).astype(jnp.float32)

    params = {
        "ln1_g": jnp.ones((1, D), jnp.float32), "ln1_b": jnp.zeros((1, D), jnp.float32),
        "ln2_g": jnp.ones((1, D), jnp.float32), "ln2_b": jnp.zeros((1, D), jnp.float32),
        "wq": w(ks[0], (D, D)), "bq": w(ks[1], (1, D)),
        "wk": w(ks[2], (D, D)), "bk": w(ks[3], (1, D)),
        "wv": w(ks[4], (D, D)), "bv": w(ks[5], (1, D)),
        "wo": w(ks[6], (D, D)), "bo": w(ks[7], (1, D)),
        "w1": w(ks[8], (D, DFF)), "b1": w(ks[9], (1, DFF)),
        "w2": w(ks[10], (DFF, D)), "b2": w(ks[11], (1, D)),
    }
    prep = prepare_params(params)   # one-time constant folds (not per call)

    xkey, _ = jax.random.split(ks[11])
    x = jax.random.normal(xkey, (B, S, D), dtype=jnp.float32)

    # mask: (B, 1, S); second batch element has its last two key positions masked out.
    mask = np.ones((B, 1, S), dtype=np.float32)
    mask[1, 0, -2:] = 0.0
    mask = jnp.asarray(mask)

    out = encoder_layer(x, mask, prep)
    out = jax.block_until_ready(out)

    ref = reference(x, mask, params)
    assert out.shape == (B, S, D)
    assert np.allclose(np.asarray(out), np.asarray(ref), rtol=1e-4, atol=1e-4), (
        "mismatch vs pure-JAX reference")

    print("KERNEL_OK")
</pallas_src>

<mosaic_0001>
module attributes {stable_mosaic.version = 11 : i64} {
  func.func @encoder_layer_kernel(%arg0: memref<16x32xf32, #tpu.memory_space<vmem>>, %arg1: memref<8x1x8xf32, #tpu.memory_space<vmem>>, %arg2: memref<1x32xf32, #tpu.memory_space<vmem>>, %arg3: memref<1x32xf32, #tpu.memory_space<vmem>>, %arg4: memref<32x96xf32, #tpu.memory_space<vmem>>, %arg5: memref<1x96xf32, #tpu.memory_space<vmem>>, %arg6: memref<8x8x32xf32, #tpu.memory_space<vmem>>, %arg7: memref<1x32xf32, #tpu.memory_space<vmem>>, %arg8: memref<1x32xf32, #tpu.memory_space<vmem>>, %arg9: memref<1x32xf32, #tpu.memory_space<vmem>>, %arg10: memref<32x64xf32, #tpu.memory_space<vmem>>, %arg11: memref<1x64xf32, #tpu.memory_space<vmem>>, %arg12: memref<64x32xf32, #tpu.memory_space<vmem>>, %arg13: memref<1x32xf32, #tpu.memory_space<vmem>>, %arg14: memref<16x32xf32, #tpu.memory_space<vmem>>) attributes {dimension_semantics = [], scalar_prefetch = 0 : i64, scratch_operands = 0 : i64, tpu.core_type = #tpu.core_type<tc>} {
    %c0 = arith.constant 0 : index
    %c0_0 = arith.constant 0 : index
    %0 = vector.load %arg0[%c0, %c0_0] : memref<16x32xf32, #tpu.memory_space<vmem>>, vector<16x32xf32>
    %c0_1 = arith.constant 0 : index
    %c0_2 = arith.constant 0 : index
    %c0_3 = arith.constant 0 : index
    %1 = vector.load %arg1[%c0_1, %c0_2, %c0_3] : memref<8x1x8xf32, #tpu.memory_space<vmem>>, vector<8x1x8xf32>
    %c0_4 = arith.constant 0 : index
    %c0_5 = arith.constant 0 : index
    %2 = vector.load %arg2[%c0_4, %c0_5] : memref<1x32xf32, #tpu.memory_space<vmem>>, vector<1x32xf32>
    %c0_6 = arith.constant 0 : index
    %c0_7 = arith.constant 0 : index
    %3 = vector.load %arg3[%c0_6, %c0_7] : memref<1x32xf32, #tpu.memory_space<vmem>>, vector<1x32xf32>
    %cst = arith.constant dense<0.000000e+00> : vector<16xf32>
    %4 = vector.multi_reduction <add>, %0, %cst [1] : vector<16x32xf32> to vector<16xf32>
    %5 = vector.shape_cast %4 : vector<16xf32> to vector<16x1xf32>
    %cst_8 = arith.constant 3.125000e-02 : f32
    %6 = vector.broadcast %cst_8 : f32 to vector<16x1xf32>
    %7 = arith.mulf %5, %6 : vector<16x1xf32>
    %8 = vector.broadcast %7 : vector<16x1xf32> to vector<16x32xf32>
    %9 = arith.subf %0, %8 : vector<16x32xf32>
    %10 = arith.mulf %9, %9 : vector<16x32xf32>
    %cst_9 = arith.constant dense<0.000000e+00> : vector<16xf32>
    %11 = vector.multi_reduction <add>, %10, %cst_9 [1] : vector<16x32xf32> to vector<16xf32>
    %12 = vector.shape_cast %11 : vector<16xf32> to vector<16x1xf32>
    %cst_10 = arith.constant 0.0322580636 : f32
    %13 = vector.broadcast %cst_10 : f32 to vector<16x1xf32>
    %14 = arith.mulf %12, %13 : vector<16x1xf32>
    %15 = math.sqrt %14 : vector<16x1xf32>
    %cst_11 = arith.constant 9.99999997E-7 : f32
    %16 = vector.broadcast %cst_11 : f32 to vector<16x1xf32>
    %17 = arith.addf %15, %16 : vector<16x1xf32>
    %cst_12 = arith.constant 1.000000e+00 : f32
    %18 = vector.broadcast %cst_12 : f32 to vector<16x1xf32>
    %19 = arith.divf %18, %17 : vector<16x1xf32>
    %20 = vector.broadcast %7 : vector<16x1xf32> to vector<16x32xf32>
    %21 = arith.subf %0, %20 : vector<16x32xf32>
    %22 = vector.broadcast %19 : vector<16x1xf32> to vector<16x32xf32>
    %23 = arith.mulf %21, %22 : vector<16x32xf32>
    %24 = vector.broadcast %2 : vector<1x32xf32> to vector<16x32xf32>
    %25 = arith.mulf %24, %23 : vector<16x32xf32>
    %26 = vector.broadcast %3 : vector<1x32xf32> to vector<16x32xf32>
    %27 = arith.addf %25, %26 : vector<16x32xf32>
    %c0_13 = arith.constant 0 : index
    %c0_14 = arith.constant 0 : index
    %28 = vector.load %arg4[%c0_13, %c0_14] : memref<32x96xf32, #tpu.memory_space<vmem>>, vector<32x96xf32>
    %cst_15 = arith.constant dense<0.000000e+00> : vector<16x96xf32>
    %29 = tpu.matmul %27, %28, %cst_15 {dimension_numbers = #tpu.dot_dimension_numbers<[1], [0], [0], [1], [0, 0, 1, 1], [], []>} : vector<16x32xf32>, vector<32x96xf32>, vector<16x96xf32> -> vector<16x96xf32>
    %c0_16 = arith.constant 0 : index
    %c0_17 = arith.constant 0 : index
    %30 = vector.load %arg5[%c0_16, %c0_17] : memref<1x96xf32, #tpu.memory_space<vmem>>, vector<1x96xf32>
    %31 = vector.broadcast %30 : vector<1x96xf32> to vector<16x96xf32>
    %32 = arith.addf %29, %31 : vector<16x96xf32>
    %33 = vector.extract_strided_slice %32 {offsets = [0, 0], sizes = [16, 8], strides = [1, 1]} : vector<16x96xf32> to vector<16x8xf32>
    %34 = vector.shape_cast %33 : vector<16x8xf32> to vector<2x8x8xf32>
    %35 = vector.extract_strided_slice %32 {offsets = [0, 8], sizes = [16, 8], strides = [1, 1]} : vector<16x96xf32> to vector<16x8xf32>
    %36 = vector.shape_cast %35 : vector<16x8xf32> to vector<2x8x8xf32>
    %37 = vector.extract_strided_slice %32 {offsets = [0, 16], sizes = [16, 8], strides = [1, 1]} : vector<16x96xf32> to vector<16x8xf32>
    %38 = vector.shape_cast %37 : vector<16x8xf32> to vector<2x8x8xf32>
    %39 = vector.extract_strided_slice %32 {offsets = [0, 24], sizes = [16, 8], strides = [1, 1]} : vector<16x96xf32> to vector<16x8xf32>
    %40 = vector.shape_cast %39 : vector<16x8xf32> to vector<2x8x8xf32>
    %41 = tpu.concatenate %34, %36, %38, %40 in 0 : vector<2x8x8xf32>, vector<2x8x8xf32>, vector<2x8x8xf32>, vector<2x8x8xf32> -> vector<8x8x8xf32>
    %42 = vector.extract_strided_slice %32 {offsets = [0, 32], sizes = [16, 8], strides = [1, 1]} : vector<16x96xf32> to vector<16x8xf32>
    %43 = vector.shape_cast %42 : vector<16x8xf32> to vector<2x8x8xf32>
    %44 = vector.extract_strided_slice %32 {offsets = [0, 40], sizes = [16, 8], strides = [1, 1]} : vector<16x96xf32> to vector<16x8xf32>
    %45 = vector.shape_cast %44 : vector<16x8xf32> to vector<2x8x8xf32>
    %46 = vector.extract_strided_slice %32 {offsets = [0, 48], sizes = [16, 8], strides = [1, 1]} : vector<16x96xf32> to vector<16x8xf32>
    %47 = vector.shape_cast %46 : vector<16x8xf32> to vector<2x8x8xf32>
    %48 = vector.extract_strided_slice %32 {offsets = [0, 56], sizes = [16, 8], strides = [1, 1]} : vector<16x96xf32> to vector<16x8xf32>
    %49 = vector.shape_cast %48 : vector<16x8xf32> to vector<2x8x8xf32>
    %50 = tpu.concatenate %43, %45, %47, %49 in 0 : vector<2x8x8xf32>, vector<2x8x8xf32>, vector<2x8x8xf32>, vector<2x8x8xf32> -> vector<8x8x8xf32>
    %51 = vector.extract_strided_slice %32 {offsets = [0, 64], sizes = [16, 8], strides = [1, 1]} : vector<16x96xf32> to vector<16x8xf32>
    %52 = vector.shape_cast %51 : vector<16x8xf32> to vector<2x8x8xf32>
    %53 = vector.extract_strided_slice %32 {offsets = [0, 72], sizes = [16, 8], strides = [1, 1]} : vector<16x96xf32> to vector<16x8xf32>
    %54 = vector.shape_cast %53 : vector<16x8xf32> to vector<2x8x8xf32>
    %55 = vector.extract_strided_slice %32 {offsets = [0, 80], sizes = [16, 8], strides = [1, 1]} : vector<16x96xf32> to vector<16x8xf32>
    %56 = vector.shape_cast %55 : vector<16x8xf32> to vector<2x8x8xf32>
    %57 = vector.extract_strided_slice %32 {offsets = [0, 88], sizes = [16, 8], strides = [1, 1]} : vector<16x96xf32> to vector<16x8xf32>
    %58 = vector.shape_cast %57 : vector<16x8xf32> to vector<2x8x8xf32>
    %59 = tpu.concatenate %52, %54, %56, %58 in 0 : vector<2x8x8xf32>, vector<2x8x8xf32>, vector<2x8x8xf32>, vector<2x8x8xf32> -> vector<8x8x8xf32>
    "tpu.trace_start"() <{level = 10 : i32, message = "nqd,nkd->nqk"}> : () -> ()
    %cst_18 = arith.constant dense<0.000000e+00> : vector<8x8x8xf32>
    %60 = tpu.matmul %41, %50, %cst_18 {dimension_numbers = #tpu.dot_dimension_numbers<[2], [2], [1], [1], [0, 0, 0, 1, 1, 1], [0], [0]>} : vector<8x8x8xf32>, vector<8x8x8xf32>, vector<8x8x8xf32> -> vector<8x8x8xf32>
    "tpu.trace_stop"() : () -> ()
    %61 = vector.broadcast %1 : vector<8x1x8xf32> to vector<8x8x8xf32>
    %62 = arith.addf %60, %61 : vector<8x8x8xf32>
    %cst_19 = arith.constant dense<0xFF800000> : vector<8x8xf32>
    %63 = vector.multi_reduction <maximumf>, %62, %cst_19 [2] : vector<8x8x8xf32> to vector<8x8xf32>
    %64 = vector.shape_cast %63 : vector<8x8xf32> to vector<8x8x1xf32>
    %65 = vector.broadcast %64 : vector<8x8x1xf32> to vector<8x8x8xf32>
    %66 = arith.subf %62, %65 : vector<8x8x8xf32>
    %67 = math.exp %66 : vector<8x8x8xf32>
    %cst_20 = arith.constant dense<0.000000e+00> : vector<8x8xf32>
    %68 = vector.multi_reduction <add>, %67, %cst_20 [2] : vector<8x8x8xf32> to vector<8x8xf32>
    %69 = vector.shape_cast %68 : vector<8x8xf32> to vector<8x8x1xf32>
    %cst_21 = arith.constant 1.000000e+00 : f32
    %70 = vector.broadcast %cst_21 : f32 to vector<8x8x1xf32>
    %71 = arith.divf %70, %69 : vector<8x8x1xf32>
    %72 = vector.broadcast %71 : vector<8x8x1xf32> to vector<8x8x8xf32>
    %73 = arith.mulf %67, %72 : vector<8x8x8xf32>
    "tpu.trace_start"() <{level = 10 : i32, message = "nqk,nkd->nqd"}> : () -> ()
    %cst_22 = arith.constant dense<0.000000e+00> : vector<8x8x8xf32>
    %74 = tpu.matmul %73, %59, %cst_22 {dimension_numbers = #tpu.dot_dimension_numbers<[2], [1], [1], [2], [0, 0, 0, 1, 1, 2], [0], [0]>} : vector<8x8x8xf32>, vector<8x8x8xf32>, vector<8x8x8xf32> -> vector<8x8x8xf32>
    "tpu.trace_stop"() : () -> ()
    %c0_23 = arith.constant 0 : index
    %c0_24 = arith.constant 0 : index
    %c0_25 = arith.constant 0 : index
    %75 = vector.load %arg6[%c0_23, %c0_24, %c0_25] : memref<8x8x32xf32, #tpu.memory_space<vmem>>, vector<8x8x32xf32>
    "tpu.trace_start"() <{level = 10 : i32, message = "nqd,ndo->nqo"}> : () -> ()
    %cst_26 = arith.constant dense<0.000000e+00> : vector<8x8x32xf32>
    %76 = tpu.matmul %74, %75, %cst_26 {dimension_numbers = #tpu.dot_dimension_numbers<[2], [1], [1], [2], [0, 0, 0, 1, 1, 2], [0], [0]>} : vector<8x8x8xf32>, vector<8x8x32xf32>, vector<8x8x32xf32> -> vector<8x8x32xf32>
    "tpu.trace_stop"() : () -> ()
    %77 = vector.shape_cast %76 : vector<8x8x32xf32> to vector<4x16x32xf32>
    %cst_27 = arith.constant dense<0.000000e+00> : vector<16x32xf32>
    %78 = vector.multi_reduction <add>, %77, %cst_27 [0] : vector<4x16x32xf32> to vector<16x32xf32>
    %c0_28 = arith.constant 0 : index
    %c0_29 = arith.constant 0 : index
    %79 = vector.load %arg7[%c0_28, %c0_29] : memref<1x32xf32, #tpu.memory_space<vmem>>, vector<1x32xf32>
    %80 = vector.broadcast %79 : vector<1x32xf32> to vector<16x32xf32>
    %81 = arith.addf %78, %80 : vector<16x32xf32>
    %82 = arith.addf %0, %81 : vector<16x32xf32>
    %c0_30 = arith.constant 0 : index
    %c0_31 = arith.constant 0 : index
    %83 = vector.load %arg8[%c0_30, %c0_31] : memref<1x32xf32, #tpu.memory_space<vmem>>, vector<1x32xf32>
    %c0_32 = arith.constant 0 : index
    %c0_33 = arith.constant 0 : index
    %84 = vector.load %arg9[%c0_32, %c0_33] : memref<1x32xf32, #tpu.memory_space<vmem>>, vector<1x32xf32>
    %cst_34 = arith.constant dense<0.000000e+00> : vector<16xf32>
    %85 = vector.multi_reduction <add>, %82, %cst_34 [1] : vector<16x32xf32> to vector<16xf32>
    %86 = vector.shape_cast %85 : vector<16xf32> to vector<16x1xf32>
    %cst_35 = arith.constant 3.125000e-02 : f32
    %87 = vector.broadcast %cst_35 : f32 to vector<16x1xf32>
    %88 = arith.mulf %86, %87 : vector<16x1xf32>
    %89 = vector.broadcast %88 : vector<16x1xf32> to vector<16x32xf32>
    %90 = arith.subf %82, %89 : vector<16x32xf32>
    %91 = arith.mulf %90, %90 : vector<16x32xf32>
    %cst_36 = arith.constant dense<0.000000e+00> : vector<16xf32>
    %92 = vector.multi_reduction <add>, %91, %cst_36 [1] : vector<16x32xf32> to vector<16xf32>
    %93 = vector.shape_cast %92 : vector<16xf32> to vector<16x1xf32>
    %cst_37 = arith.constant 0.0322580636 : f32
    %94 = vector.broadcast %cst_37 : f32 to vector<16x1xf32>
    %95 = arith.mulf %93, %94 : vector<16x1xf32>
    %96 = math.sqrt %95 : vector<16x1xf32>
    %cst_38 = arith.constant 9.99999997E-7 : f32
    %97 = vector.broadcast %cst_38 : f32 to vector<16x1xf32>
    %98 = arith.addf %96, %97 : vector<16x1xf32>
    %cst_39 = arith.constant 1.000000e+00 : f32
    %99 = vector.broadcast %cst_39 : f32 to vector<16x1xf32>
    %100 = arith.divf %99, %98 : vector<16x1xf32>
    %101 = vector.broadcast %88 : vector<16x1xf32> to vector<16x32xf32>
    %102 = arith.subf %82, %101 : vector<16x32xf32>
    %103 = vector.broadcast %100 : vector<16x1xf32> to vector<16x32xf32>
    %104 = arith.mulf %102, %103 : vector<16x32xf32>
    %105 = vector.broadcast %83 : vector<1x32xf32> to vector<16x32xf32>
    %106 = arith.mulf %105, %104 : vector<16x32xf32>
    %107 = vector.broadcast %84 : vector<1x32xf32> to vector<16x32xf32>
    %108 = arith.addf %106, %107 : vector<16x32xf32>
    %c0_40 = arith.constant 0 : index
    %c0_41 = arith.constant 0 : index
    %109 = vector.load %arg10[%c0_40, %c0_41] : memref<32x64xf32, #tpu.memory_space<vmem>>, vector<32x64xf32>
    %cst_42 = arith.constant dense<0.000000e+00> : vector<16x64xf32>
    %110 = tpu.matmul %108, %109, %cst_42 {dimension_numbers = #tpu.dot_dimension_numbers<[1], [0], [0], [1], [0, 0, 1, 1], [], []>} : vector<16x32xf32>, vector<32x64xf32>, vector<16x64xf32> -> vector<16x64xf32>
    %c0_43 = arith.constant 0 : index
    %c0_44 = arith.constant 0 : index
    %111 = vector.load %arg11[%c0_43, %c0_44] : memref<1x64xf32, #tpu.memory_space<vmem>>, vector<1x64xf32>
    %112 = vector.broadcast %111 : vector<1x64xf32> to vector<16x64xf32>
    %113 = arith.addf %110, %112 : vector<16x64xf32>
    %cst_45 = arith.constant 0.000000e+00 : f32
    %114 = vector.broadcast %cst_45 : f32 to vector<16x64xf32>
    %115 = arith.maximumf %113, %114 : vector<16x64xf32>
    %c0_46 = arith.constant 0 : index
    %c0_47 = arith.constant 0 : index
    %116 = vector.load %arg12[%c0_46, %c0_47] : memref<64x32xf32, #tpu.memory_space<vmem>>, vector<64x32xf32>
    %cst_48 = arith.constant dense<0.000000e+00> : vector<16x32xf32>
    %117 = tpu.matmul %115, %116, %cst_48 {dimension_numbers = #tpu.dot_dimension_numbers<[1], [0], [0], [1], [0, 0, 1, 1], [], []>} : vector<16x64xf32>, vector<64x32xf32>, vector<16x32xf32> -> vector<16x32xf32>
    %c0_49 = arith.constant 0 : index
    %c0_50 = arith.constant 0 : index
    %118 = vector.load %arg13[%c0_49, %c0_50] : memref<1x32xf32, #tpu.memory_space<vmem>>, vector<1x32xf32>
    %119 = vector.broadcast %118 : vector<1x32xf32> to vector<16x32xf32>
    %120 = arith.addf %117, %119 : vector<16x32xf32>
    %121 = arith.addf %82, %120 : vector<16x32xf32>
    %c0_51 = arith.constant 0 : index
    %c0_52 = arith.constant 0 : index
    %122 = vector.load %arg14[%c0_51, %c0_52] : memref<16x32xf32, #tpu.memory_space<vmem>>, vector<16x32xf32>
    tpu.vector_store %arg14[%c0_51, %c0_52], %121 {strides = array<i32>} : memref<16x32xf32, #tpu.memory_space<vmem>>, vector<16x32xf32>,
    return
  }
}

</mosaic_0001>

<llo_original>
// kernel: encoder_layer.1
$region0: #{encoder_layer.1}
  #allocation0 [shape = 'u32[]', space=smem, size = 0x4, offset = 0x4, fixed_abs, tag = 'smem constant byte address 0x4 - core index']
  #allocation1 [shape = 'u32[72,128]{1,0:T(1,128)}', space=vmem, size = 0x9000, scoped, tag = 'internal scratch']
  %s0 = inlined_call_operand.vmem [shape: f32[16,32], index: 0, kind: input, shape index: {}]
  %s1 = inlined_call_operand.vmem [shape: f32[8,1,8], index: 1, kind: input, shape index: {}]
  %s2 = inlined_call_operand.vmem [shape: f32[1,32], index: 2, kind: input, shape index: {}]
  %s3 = inlined_call_operand.vmem [shape: f32[1,32], index: 3, kind: input, shape index: {}]
  %s4 = inlined_call_operand.vmem [shape: f32[32,96], index: 4, kind: input, shape index: {}]
  %s5 = inlined_call_operand.vmem [shape: f32[1,96], index: 5, kind: input, shape index: {}]
  %s6 = inlined_call_operand.vmem [shape: f32[8,8,32], index: 6, kind: input, shape index: {}]
  %s7 = inlined_call_operand.vmem [shape: f32[1,32], index: 7, kind: input, shape index: {}]
  %s8 = inlined_call_operand.vmem [shape: f32[1,32], index: 8, kind: input, shape index: {}]
  %s9 = inlined_call_operand.vmem [shape: f32[1,32], index: 9, kind: input, shape index: {}]
  %s10 = inlined_call_operand.hbm [shape: f32[32,64], index: 10, kind: input, shape index: {}]
  %s11 = inlined_call_operand.vmem [shape: f32[1,64], index: 11, kind: input, shape index: {}]
  %s12 = inlined_call_operand.vmem [shape: f32[64,32], index: 12, kind: input, shape index: {}]
  %s13 = inlined_call_operand.vmem [shape: f32[1,32], index: 13, kind: input, shape index: {}]
  %s14 = inlined_call_operand.hbm [shape: f32[16,32], index: 14, kind: output, shape index: {}]
  %s15 = sld [smem:[#allocation0]]
  $region70: #{encoder_layer.1} parent=0
    _
  %s17 = ssub.s32 1, %s15
  %s18 = scalar_select 0, %s17, %s15
  $region1: #{encoder_layer.1} parent=0
    #allocation2 [shape = 'u8[16384]{0}', space=vmem, size = 0x4000, scoped, tag = 'input window, operand 10, single buffered']
    #allocation3 [shape = 's32[1]{0}', space=sflag, size = 0x4, scoped, tag = 'scoped memory for encoder_layer.1']
    #allocation4 [shape = 's32[1]{0}', space=sflag, size = 0x4, scoped, tag = 'scoped memory for encoder_layer.1']
    #allocation5 [shape = 'u8[8192]{0}', space=vmem, size = 0x2000, scoped, tag = 'output window, operand 0, single buffered']
    %19 = vsyncpa [#allocation3], 0
    %20 = vsyncpa [#allocation4], 0
    // Predicated region
    $region2: #{encoder_layer.1} parent=1 // pred_check
      _
    $region3: #{encoder_layer.1} parent=1 // pred_check_branch
      %22 = sbr.rel (0) target = $region5
    $region4: #{encoder_layer.1} parent=1 // pred_region
      _
    $region5: #{encoder_layer.1} parent=1 // pred_fallthru
      _
    // Predicated region
    $region6: #{encoder_layer.1} parent=1 // pred_check
      _
    $region7: #{encoder_layer.1} parent=1 // pred_check_branch
      %24 = sbr.rel (0) target = $region9
    $region8: #{encoder_layer.1} parent=1 // pred_region
      _
    $region9: #{encoder_layer.1} parent=1 // pred_fallthru
      _
    // Predicated region
    $region10: #{encoder_layer.1} parent=1 // pred_check
      _
    $region11: #{encoder_layer.1} parent=1 // pred_check_branch
      %26 = sbr.rel (0) target = $region13
    $region12: #{encoder_layer.1} parent=1 // pred_region
      _
    $region13: #{encoder_layer.1} parent=1 // pred_fallthru
      _
    // Predicated region
    $region14: #{encoder_layer.1} parent=1 // pred_check
      _
    $region15: #{encoder_layer.1} parent=1 // pred_check_branch
      %28 = sbr.rel (0) target = $region17
    $region16: #{encoder_layer.1} parent=1 // pred_region
      _
    $region17: #{encoder_layer.1} parent=1 // pred_fallthru
      _
    // Predicated region
    $region18: #{encoder_layer.1} parent=1 // pred_check
      _
    $region19: #{encoder_layer.1} parent=1 // pred_check_branch
      %30 = sbr.rel (0) target = $region21
    $region20: #{encoder_layer.1} parent=1 // pred_region
      _
    $region21: #{encoder_layer.1} parent=1 // pred_fallthru
      _
    // Predicated region
    $region22: #{encoder_layer.1} parent=1 // pred_check
      _
    $region23: #{encoder_layer.1} parent=1 // pred_check_branch
      %32 = sbr.rel (0) target = $region25
    $region24: #{encoder_layer.1} parent=1 // pred_region
      _
    $region25: #{encoder_layer.1} parent=1 // pred_fallthru
      _
    // Predicated region
    $region26: #{encoder_layer.1} parent=1 // pred_check
      _
    $region27: #{encoder_layer.1} parent=1 // pred_check_branch
      %34 = sbr.rel (0) target = $region29
    $region28: #{encoder_layer.1} parent=1 // pred_region
      _
    $region29: #{encoder_layer.1} parent=1 // pred_fallthru
      _
    // Predicated region
    $region30: #{encoder_layer.1} parent=1 // pred_check
      _
    $region31: #{encoder_layer.1} parent=1 // pred_check_branch
      %36 = sbr.rel (0) target = $region33
    $region32: #{encoder_layer.1} parent=1 // pred_region
      _
    $region33: #{encoder_layer.1} parent=1 // pred_fallthru
      _
    // Predicated region
    $region34: #{encoder_layer.1} parent=1 // pred_check
      _
    $region35: #{encoder_layer.1} parent=1 // pred_check_branch
      %38 = sbr.rel (0) target = $region37
    $region36: #{encoder_layer.1} parent=1 // pred_region
      _
    $region37: #{encoder_layer.1} parent=1 // pred_fallthru
      _
    // Predicated region
    $region38: #{encoder_layer.1} parent=1 // pred_check
      _
    $region39: #{encoder_layer.1} parent=1 // pred_check_branch
      %40 = sbr.rel (0) target = $region41
    $region40: #{encoder_layer.1} parent=1 // pred_region
      _
    $region41: #{encoder_layer.1} parent=1 // pred_fallthru
      _
    // Predicated region
    $region42: #{encoder_layer.1} parent=1 // pred_check
      _
    $region43: #{encoder_layer.1} parent=1 // pred_check_branch
      %42 = sbr.rel (0) target = $region45
    $region44: #{encoder_layer.1} parent=1 // pred_region
      %44 = vsyncadd [#allocation3], 0
      %s45 = sshll.u32 %s10, 4
      %s46 = int_to_ptr.hbm [resolvable:$true] %s45
      %s47 = sshll.u32 [#allocation2], 4
      %s48 = int_to_ptr.vmem [resolvable:$true] %s47
      %53 = dma.hbm_to_vmem [thread:$0]  %s46, 512, %s48, [#allocation3], 128, 128, 8
    $region45: #{encoder_layer.1} parent=1 // pred_fallthru
      _
    // Predicated region
    $region46: #{encoder_layer.1} parent=1 // pred_check
      _
    $region47: #{encoder_layer.1} parent=1 // pred_check_branch
      %55 = sbr.rel (0) target = $region49
    $region48: #{encoder_layer.1} parent=1 // pred_region
      _
    $region49: #{encoder_layer.1} parent=1 // pred_fallthru
      _
    // Predicated region
    $region50: #{encoder_layer.1} parent=1 // pred_check
      _
    $region51: #{encoder_layer.1} parent=1 // pred_check_branch
      %57 = sbr.rel (0) target = $region53
    $region52: #{encoder_layer.1} parent=1 // pred_region
      _
    $region53: #{encoder_layer.1} parent=1 // pred_fallthru
      _
    // Predicated region
    $region54: #{encoder_layer.1} parent=1 // pred_check
      _
    $region55: #{encoder_layer.1} parent=1 // pred_check_branch
      %59 = sbr.rel (0) target = $region57
    $region56: #{encoder_layer.1} parent=1 // pred_region
      _
    $region57: #{encoder_layer.1} parent=1 // pred_fallthru
      _
    // Predicated region
    $region58: #{encoder_layer.1} parent=1 // pred_check
      _
    $region59: #{encoder_layer.1} parent=1 // pred_check_branch
      %61 = sbr.rel (0) target = $region61
    $region60: #{encoder_layer.1} parent=1 // pred_region
      %63 = dma.done [#allocation3], 512
    $region61: #{encoder_layer.1} parent=1 // pred_fallthru
      _
    %v64 = vld [vmem:[%s0] sm:$0xff]
    %v65 = vld [vmem:[%s0 + $0x8] sm:$0xff]
    %v66 = vld [vmem:[%s1] sm:$0x1]
    %v67 = vld [vmem:[%s1 + $0x1] sm:$0x1]
    %v68 = vld [vmem:[%s1 + $0x2] sm:$0x1]
    %v69 = vld [vmem:[%s1 + $0x3] sm:$0x1]
    %v70 = vld [vmem:[%s1 + $0x4] sm:$0x1]
    %v71 = vld [vmem:[%s1 + $0x5] sm:$0x1]
    %v72 = vld [vmem:[%s1 + $0x6] sm:$0x1]
    %v73 = vld [vmem:[%s1 + $0x7] sm:$0x1]
    %v74 = vld [vmem:[%s2] sm:$0x1]
    %v75 = vld [vmem:[%s3] sm:$0x1]
    %vm76 = vcmask 261120
    %v77 = vsel %vm76, %v64, 0.0
    %78 = vadd.xlane.f32.xlu0 %v77
    %v79 = vpop.xlane.xlu0 %78
    %v80 = vsel %vm76, %v65, 0.0
    %81 = vadd.xlane.f32.xlu0 %v80
    %v82 = vpop.xlane.xlu0 %81
    %v83 = vmul.f32 %v79, 0.03125
    %v84 = vmul.f32 %v82, 0.03125
    %v85 = vsub.f32 %v64, %v83
    %v86 = vsub.f32 %v65, %v84
    %v87 = vmul.f32 %v85, %v85
    %v88 = vmul.f32 %v86, %v86
    %v89 = vsel %vm76, %v87, 0.0
    %90 = vadd.xlane.f32.xlu0 %v89
    %v91 = vpop.xlane.xlu0 %90
    %v92 = vsel %vm76, %v88, 0.0
    %93 = vadd.xlane.f32.xlu0 %v92
    %v94 = vpop.xlane.xlu0 %93
    %v95 = vmul.f32 %v91, 0.032258064
    %v96 = vmul.f32 %v94, 0.032258064
    %v97 = vrsqrt.pop %v95
    %v98 = vmul.f32 %v97, %v95
    %v99 = vmul.f32 %v98, %v97
    %v100 = vmul.f32 0.5, %v99
    %v101 = vsub.f32 1.5, %v100
    %v102 = vmul.f32 %v97, %v101
    %v103 = vmul.f32 %v95, %v102
    %vm104 = vcmp.eq.f32.partialorder %v95, inf
    %v105 = vsel %vm104, %v95, %v103
    %vm106 = vcmp.eq.f32.partialorder %v95, 0.0
    %v107 = vand.u32 %v95, 2147483648
    %v108 = vsel %vm106, %v107, %v105
    %v109 = vrsqrt.pop %v96
    %v110 = vmul.f32 %v109, %v96
    %v111 = vmul.f32 %v110, %v109
    %v112 = vmul.f32 0.5, %v111
    %v113 = vsub.f32 1.5, %v112
    %v114 = vmul.f32 %v109, %v113
    %v115 = vmul.f32 %v96, %v114
    %vm116 = vcmp.eq.f32.partialorder %v96, inf
    %v117 = vsel %vm116, %v96, %v115
    %vm118 = vcmp.eq.f32.partialorder %v96, 0.0
    %v119 = vand.u32 %v96, 2147483648
    %v120 = vsel %vm118, %v119, %v117
    %v121 = vadd.f32 %v108, 1e-06
    %v122 = vadd.f32 %v120, 1e-06
    %v123 = vrcp.pop %v121
    %v124 = vmul.f32 %v121, %v123
    %v125 = vsub.f32 1.0, %v124
    %v126 = vmul.f32 %v123, %v125
    %v127 = vadd.f32 %v123, %v126
    %vm128 = vweird.f32 %v121
    %vm129 = vweird.f32 %v123
    %vm130 = vmor %vm128, %vm129
    %v131 = vsel %vm130, %v123, %v127
    %v132 = vand.u32 2147483647, %v121
    %vm133 = vcmp.eq.f32.partialorder %v132, 8.507059e+37
    %v134 = vand.u32 %v121, 2147483648
    %v135 = vor.u32 1.1754944e-38, %v134
    %v136 = vsel %vm133, %v135, %v131
    %v137 = vmul.f32 1.0, %v136
    %v138 = vrcp.pop %v122
    %v139 = vmul.f32 %v122, %v138
    %v140 = vsub.f32 1.0, %v139
    %v141 = vmul.f32 %v138, %v140
    %v142 = vadd.f32 %v138, %v141
    %vm143 = vweird.f32 %v122
    %vm144 = vweird.f32 %v138
    %vm145 = vmor %vm143, %vm144
    %v146 = vsel %vm145, %v138, %v142
    %v147 = vand.u32 2147483647, %v122
    %vm148 = vcmp.eq.f32.partialorder %v147, 8.507059e+37
    %v149 = vand.u32 %v122, 2147483648
    %v150 = vor.u32 1.1754944e-38, %v149
    %v151 = vsel %vm148, %v150, %v146
    %v152 = vmul.f32 1.0, %v151
    %v153 = vmul.f32 %v85, %v137
    %v154 = vmul.f32 %v86, %v152
    %v156 = vperm.slane %v74, 0
    %v158 = vmul.f32 %v156, %v153
    %v159 = vmul.f32 %v156, %v154
    %v161 = vperm.slane %v75, 0
    %v163 = vadd.f32 %v158, %v161
    %v164 = vadd.f32 %v159, %v161
    %v165 = vld [vmem:[%s4] sm:$0xff]
    %v166 = vld [vmem:[%s4 + $0x8] sm:$0xff]
    %v167 = vld [vmem:[%s4 + $0x10] sm:$0xff]
    %v168 = vld [vmem:[%s4 + $0x18] sm:$0xff]
    %v169 = vld [vmem:[%s5] sm:$0x1]
    %v171 = vperm.slane %v169, 0
    %v174 = vsel %vm76, %v163, 0
    %v177 = vsel %vm76, %v164, 0
    %179 = vmatpush.msra.mxu0 0.0
    %180 = vmatpush.msra.mxu0 0.0
    %181 = vmatpush.msra.mxu0 0.0
    %182 = vmatpush.msra.mxu0 0.0
    %183 = vmatpush.msra.mxu0 0.0
    %184 = vmatpush.msra.mxu0 0.0
    %185 = vmatpush.msra.mxu0 0.0
    %186 = vmatpush.msra.mxu0 0.0
    %187 = vmatpush.msra.mxu0 0.0
    %188 = vmatpush.msra.mxu0 0.0
    %189 = vmatpush.msra.mxu0 0.0
    %190 = vmatpush.msra.mxu0 0.0
    %191 = vmatpush.msra.mxu0 %v168
    %192 = vmatpush.msra.mxu0 %v167
    %193 = vmatpush.msra.mxu0 %v166
    %194 = vmatpush.msra.mxu0 %v165
    %195 = vmatmul.f32.gmra.mxu0 %v174
    %v196 = vpop.f32.mrf.mxu0
    %v197 = vadd.f32 %v171, %v196
    %198 = vmatmul.f32.gmra.mxu0 %v177
    %v199 = vpop.f32.mrf.mxu0
    %v200 = vadd.f32 %v171, %v199
    %201 = vdwg.mxu0
    %204 = vrot.lane.b32.xlu0 %v197, 120
    %v205 = vpop.permute.xlu0 %204
    %206 = vrot.lane.b32.xlu0 %v200, 120
    %v207 = vpop.permute.xlu0 %206
    %208 = vrot.lane.b32.xlu0 %v197, 112
    %v209 = vpop.permute.xlu0 %208
    %210 = vrot.lane.b32.xlu0 %v200, 112
    %v211 = vpop.permute.xlu0 %210
    %212 = vrot.lane.b32.xlu0 %v197, 104
    %v213 = vpop.permute.xlu0 %212
    %214 = vrot.lane.b32.xlu0 %v200, 104
    %v215 = vpop.permute.xlu0 %214
    %v224 = vperm.slane %v66, 0
    %v225 = vperm.slane %v67, 0
    %v226 = vperm.slane %v68, 0
    %v227 = vperm.slane %v69, 0
    %v228 = vperm.slane %v70, 0
    %v229 = vperm.slane %v71, 0
    %v230 = vperm.slane %v72, 0
    %v231 = vperm.slane %v73, 0
    %240 = vrot.lane.b32.xlu0 %v197, 96
    %v241 = vpop.permute.xlu0 %240
    %vm242 = vcmask 64512
    %v243 = vsel %vm242, %v197, 0
    %v245 = vsel %vm242, %v241, 0
    %247 = vmatpush.xpose.msra.mxu0 0.0
    %248 = vmatpush.xpose.msra.mxu0 0.0
    %249 = vmatpush.xpose.msra.mxu0 0.0
    %250 = vmatpush.xpose.msra.mxu0 0.0
    %251 = vmatpush.xpose.msra.mxu0 0.0
    %252 = vmatpush.xpose.msra.mxu0 0.0
    %253 = vmatpush.xpose.msra.mxu0 0.0
    %254 = vmatpush.xpose.msra.mxu0 0.0
    %255 = vmatpush.xpose.msra.mxu0 0.0
    %256 = vmatpush.xpose.msra.mxu0 0.0
    %257 = vmatpush.xpose.msra.mxu0 0.0
    %258 = vmatpush.xpose.msra.mxu0 0.0
    %259 = vmatpush.xpose.msra.mxu0 0.0
    %260 = vmatpush.xpose.msra.mxu0 0.0
    %261 = vmatpush.xpose.msra.mxu0 0.0
    %262 = vmatpush.xpose.msra.mxu0 %v245
    %263 = vmatmul.f32.gmra.mxu0 %v243
    %v264 = vpop.f32.mrf.mxu0
    %v265 = vadd.f32 %v224, %v264
    %266 = vdwg.mxu0
    %267 = vrot.lane.b32.xlu0 %v200, 96
    %v268 = vpop.permute.xlu0 %267
    %v269 = vsel %vm242, %v200, 0
    %v271 = vsel %vm242, %v268, 0
    %273 = vmatpush.xpose.msra.mxu0 0.0
    %274 = vmatpush.xpose.msra.mxu0 0.0
    %275 = vmatpush.xpose.msra.mxu0 0.0
    %276 = vmatpush.xpose.msra.mxu0 0.0
    %277 = vmatpush.xpose.msra.mxu0 0.0
    %278 = vmatpush.xpose.msra.mxu0 0.0
    %279 = vmatpush.xpose.msra.mxu0 0.0
    %280 = vmatpush.xpose.msra.mxu0 0.0
    %281 = vmatpush.xpose.msra.mxu0 0.0
    %282 = vmatpush.xpose.msra.mxu0 0.0
    %283 = vmatpush.xpose.msra.mxu0 0.0
    %284 = vmatpush.xpose.msra.mxu0 0.0
    %285 = vmatpush.xpose.msra.mxu0 0.0
    %286 = vmatpush.xpose.msra.mxu0 0.0
    %287 = vmatpush.xpose.msra.mxu0 0.0
    %288 = vmatpush.xpose.msra.mxu0 %v271
    %289 = vmatmul.f32.gmra.mxu0 %v269
    %v290 = vpop.f32.mrf.mxu0
    %v291 = vadd.f32 %v225, %v290
    %292 = vdwg.mxu0
    %293 = vrot.lane.b32.xlu0 %v205, 96
    %v294 = vpop.permute.xlu0 %293
    %v295 = vsel %vm242, %v205, 0
    %v297 = vsel %vm242, %v294, 0
    %299 = vmatpush.xpose.msra.mxu0 0.0
    %300 = vmatpush.xpose.msra.mxu0 0.0
    %301 = vmatpush.xpose.msra.mxu0 0.0
    %302 = vmatpush.xpose.msra.mxu0 0.0
    %303 = vmatpush.xpose.msra.mxu0 0.0
    %304 = vmatpush.xpose.msra.mxu0 0.0
    %305 = vmatpush.xpose.msra.mxu0 0.0
    %306 = vmatpush.xpose.msra.mxu0 0.0
    %307 = vmatpush.xpose.msra.mxu0 0.0
    %308 = vmatpush.xpose.msra.mxu0 0.0
    %309 = vmatpush.xpose.msra.mxu0 0.0
    %310 = vmatpush.xpose.msra.mxu0 0.0
    %311 = vmatpush.xpose.msra.mxu0 0.0
    %312 = vmatpush.xpose.msra.mxu0 0.0
    %313 = vmatpush.xpose.msra.mxu0 0.0
    %314 = vmatpush.xpose.msra.mxu0 %v297
    %315 = vmatmul.f32.gmra.mxu0 %v295
    %v316 = vpop.f32.mrf.mxu0
    %v317 = vadd.f32 %v226, %v316
    %318 = vdwg.mxu0
    %319 = vrot.lane.b32.xlu0 %v207, 96
    %v320 = vpop.permute.xlu0 %319
    %v321 = vsel %vm242, %v207, 0
    %v323 = vsel %vm242, %v320, 0
    %325 = vmatpush.xpose.msra.mxu0 0.0
    %326 = vmatpush.xpose.msra.mxu0 0.0
    %327 = vmatpush.xpose.msra.mxu0 0.0
    %328 = vmatpush.xpose.msra.mxu0 0.0
    %329 = vmatpush.xpose.msra.mxu0 0.0
    %330 = vmatpush.xpose.msra.mxu0 0.0
    %331 = vmatpush.xpose.msra.mxu0 0.0
    %332 = vmatpush.xpose.msra.mxu0 0.0
    %333 = vmatpush.xpose.msra.mxu0 0.0
    %334 = vmatpush.xpose.msra.mxu0 0.0
    %335 = vmatpush.xpose.msra.mxu0 0.0
    %336 = vmatpush.xpose.msra.mxu0 0.0
    %337 = vmatpush.xpose.msra.mxu0 0.0
    %338 = vmatpush.xpose.msra.mxu0 0.0
    %339 = vmatpush.xpose.msra.mxu0 0.0
    %340 = vmatpush.xpose.msra.mxu0 %v323
    %341 = vmatmul.f32.gmra.mxu0 %v321
    %v342 = vpop.f32.mrf.mxu0
    %v343 = vadd.f32 %v227, %v342
    %344 = vdwg.mxu0
    %345 = vrot.lane.b32.xlu0 %v209, 96
    %v346 = vpop.permute.xlu0 %345
    %v347 = vsel %vm242, %v209, 0
    %v349 = vsel %vm242, %v346, 0
    %351 = vmatpush.xpose.msra.mxu0 0.0
    %352 = vmatpush.xpose.msra.mxu0 0.0
    %353 = vmatpush.xpose.msra.mxu0 0.0
    %354 = vmatpush.xpose.msra.mxu0 0.0
    %355 = vmatpush.xpose.msra.mxu0 0.0
    %356 = vmatpush.xpose.msra.mxu0 0.0
    %357 = vmatpush.xpose.msra.mxu0 0.0
    %358 = vmatpush.xpose.msra.mxu0 0.0
    %359 = vmatpush.xpose.msra.mxu0 0.0
    %360 = vmatpush.xpose.msra.mxu0 0.0
    %361 = vmatpush.xpose.msra.mxu0 0.0
    %362 = vmatpush.xpose.msra.mxu0 0.0
    %363 = vmatpush.xpose.msra.mxu0 0.0
    %364 = vmatpush.xpose.msra.mxu0 0.0
    %365 = vmatpush.xpose.msra.mxu0 0.0
    %366 = vmatpush.xpose.msra.mxu0 %v349
    %367 = vmatmul.f32.gmra.mxu0 %v347
    %v368 = vpop.f32.mrf.mxu0
    %v369 = vadd.f32 %v228, %v368
    %370 = vdwg.mxu0
    %371 = vrot.lane.b32.xlu0 %v211, 96
    %v372 = vpop.permute.xlu0 %371
    %v373 = vsel %vm242, %v211, 0
    %v375 = vsel %vm242, %v372, 0
    %377 = vmatpush.xpose.msra.mxu0 0.0
    %378 = vmatpush.xpose.msra.mxu0 0.0
    %379 = vmatpush.xpose.msra.mxu0 0.0
    %380 = vmatpush.xpose.msra.mxu0 0.0
    %381 = vmatpush.xpose.msra.mxu0 0.0
    %382 = vmatpush.xpose.msra.mxu0 0.0
    %383 = vmatpush.xpose.msra.mxu0 0.0
    %384 = vmatpush.xpose.msra.mxu0 0.0
    %385 = vmatpush.xpose.msra.mxu0 0.0
    %386 = vmatpush.xpose.msra.mxu0 0.0
    %387 = vmatpush.xpose.msra.mxu0 0.0
    %388 = vmatpush.xpose.msra.mxu0 0.0
    %389 = vmatpush.xpose.msra.mxu0 0.0
    %390 = vmatpush.xpose.msra.mxu0 0.0
    %391 = vmatpush.xpose.msra.mxu0 0.0
    %392 = vmatpush.xpose.msra.mxu0 %v375
    %393 = vmatmul.f32.gmra.mxu0 %v373
    %v394 = vpop.f32.mrf.mxu0
    %v395 = vadd.f32 %v229, %v394
    %396 = vdwg.mxu0
    %397 = vrot.lane.b32.xlu0 %v213, 96
    %v398 = vpop.permute.xlu0 %397
    %v399 = vsel %vm242, %v213, 0
    %v401 = vsel %vm242, %v398, 0
    %403 = vmatpush.xpose.msra.mxu0 0.0
    %404 = vmatpush.xpose.msra.mxu0 0.0
    %405 = vmatpush.xpose.msra.mxu0 0.0
    %406 = vmatpush.xpose.msra.mxu0 0.0
    %407 = vmatpush.xpose.msra.mxu0 0.0
    %408 = vmatpush.xpose.msra.mxu0 0.0
    %409 = vmatpush.xpose.msra.mxu0 0.0
    %410 = vmatpush.xpose.msra.mxu0 0.0
    %411 = vmatpush.xpose.msra.mxu0 0.0
    %412 = vmatpush.xpose.msra.mxu0 0.0
    %413 = vmatpush.xpose.msra.mxu0 0.0
    %414 = vmatpush.xpose.msra.mxu0 0.0
    %415 = vmatpush.xpose.msra.mxu0 0.0
    %416 = vmatpush.xpose.msra.mxu0 0.0
    %417 = vmatpush.xpose.msra.mxu0 0.0
    %418 = vmatpush.xpose.msra.mxu0 %v401
    %419 = vmatmul.f32.gmra.mxu0 %v399
    %v420 = vpop.f32.mrf.mxu0
    %v421 = vadd.f32 %v230, %v420
    %422 = vdwg.mxu0
    %423 = vrot.lane.b32.xlu0 %v215, 96
    %v424 = vpop.permute.xlu0 %423
    %v425 = vsel %vm242, %v215, 0
    %v427 = vsel %vm242, %v424, 0
    %429 = vmatpush.xpose.msra.mxu0 0.0
    %430 = vmatpush.xpose.msra.mxu0 0.0
    %431 = vmatpush.xpose.msra.mxu0 0.0
    %432 = vmatpush.xpose.msra.mxu0 0.0
    %433 = vmatpush.xpose.msra.mxu0 0.0
    %434 = vmatpush.xpose.msra.mxu0 0.0
    %435 = vmatpush.xpose.msra.mxu0 0.0
    %436 = vmatpush.xpose.msra.mxu0 0.0
    %437 = vmatpush.xpose.msra.mxu0 0.0
    %438 = vmatpush.xpose.msra.mxu0 0.0
    %439 = vmatpush.xpose.msra.mxu0 0.0
    %440 = vmatpush.xpose.msra.mxu0 0.0
    %441 = vmatpush.xpose.msra.mxu0 0.0
    %442 = vmatpush.xpose.msra.mxu0 0.0
    %443 = vmatpush.xpose.msra.mxu0 0.0
    %444 = vmatpush.xpose.msra.mxu0 %v427
    %445 = vmatmul.f32.gmra.mxu0 %v425
    %v446 = vpop.f32.mrf.mxu0
    %v447 = vadd.f32 %v231, %v446
    %448 = vdwg.mxu0
    %v449 = vsel %vm242, %v265, -inf
    %450 = vmax.xlane.f32.xlu0 %v449
    %v451 = vpop.xlane.xlu0 %450
    %v452 = vsel %vm242, %v291, -inf
    %453 = vmax.xlane.f32.xlu0 %v452
    %v454 = vpop.xlane.xlu0 %453
    %v455 = vsel %vm242, %v317, -inf
    %456 = vmax.xlane.f32.xlu0 %v455
    %v457 = vpop.xlane.xlu0 %456
    %v458 = vsel %vm242, %v343, -inf
    %459 = vmax.xlane.f32.xlu0 %v458
    %v460 = vpop.xlane.xlu0 %459
    %v461 = vsel %vm242, %v369, -inf
    %462 = vmax.xlane.f32.xlu0 %v461
    %v463 = vpop.xlane.xlu0 %462
    %v464 = vsel %vm242, %v395, -inf
    %465 = vmax.xlane.f32.xlu0 %v464
    %v466 = vpop.xlane.xlu0 %465
    %v467 = vsel %vm242, %v421, -inf
    %468 = vmax.xlane.f32.xlu0 %v467
    %v469 = vpop.xlane.xlu0 %468
    %v470 = vsel %vm242, %v447, -inf
    %471 = vmax.xlane.f32.xlu0 %v470
    %v472 = vpop.xlane.xlu0 %471
    %v473 = vsub.f32 %v265, %v451
    %v474 = vsub.f32 %v291, %v454
    %v475 = vsub.f32 %v317, %v457
    %v476 = vsub.f32 %v343, %v460
    %v477 = vsub.f32 %v369, %v463
    %v478 = vsub.f32 %v395, %v466
    %v479 = vsub.f32 %v421, %v469
    %v480 = vsub.f32 %v447, %v472
    %v481 = vmul.f32 %v473, 1.442695
    %v482 = vpow.pop %v481
    %v483 = vmul.f32 %v474, 1.442695
    %v484 = vpow.pop %v483
    %v485 = vmul.f32 %v475, 1.442695
    %v486 = vpow.pop %v485
    %v487 = vmul.f32 %v476, 1.442695
    %v488 = vpow.pop %v487
    %v489 = vmul.f32 %v477, 1.442695
    %v490 = vpow.pop %v489
    %v491 = vmul.f32 %v478, 1.442695
    %v492 = vpow.pop %v491
    %v493 = vmul.f32 %v479, 1.442695
    %v494 = vpow.pop %v493
    %v495 = vmul.f32 %v480, 1.442695
    %v496 = vpow.pop %v495
    %v497 = vsel %vm242, %v482, 0.0
    %498 = vadd.xlane.f32.xlu0 %v497
    %v499 = vpop.xlane.xlu0 %498
    %v500 = vsel %vm242, %v484, 0.0
    %501 = vadd.xlane.f32.xlu0 %v500
    %v502 = vpop.xlane.xlu0 %501
    %v503 = vsel %vm242, %v486, 0.0
    %504 = vadd.xlane.f32.xlu0 %v503
    %v505 = vpop.xlane.xlu0 %504
    %v506 = vsel %vm242, %v488, 0.0
    %507 = vadd.xlane.f32.xlu0 %v506
    %v508 = vpop.xlane.xlu0 %507
    %v509 = vsel %vm242, %v490, 0.0
    %510 = vadd.xlane.f32.xlu0 %v509
    %v511 = vpop.xlane.xlu0 %510
    %v512 = vsel %vm242, %v492, 0.0
    %513 = vadd.xlane.f32.xlu0 %v512
    %v514 = vpop.xlane.xlu0 %513
    %v515 = vsel %vm242, %v494, 0.0
    %516 = vadd.xlane.f32.xlu0 %v515
    %v517 = vpop.xlane.xlu0 %516
    %v518 = vsel %vm242, %v496, 0.0
    %519 = vadd.xlane.f32.xlu0 %v518
    %v520 = vpop.xlane.xlu0 %519
    %v521 = vrcp.pop %v499
    %v522 = vmul.f32 %v499, %v521
    %v523 = vsub.f32 1.0, %v522
    %v524 = vmul.f32 %v521, %v523
    %v525 = vadd.f32 %v521, %v524
    %vm526 = vweird.f32 %v499
    %vm527 = vweird.f32 %v521
    %vm528 = vmor %vm526, %vm527
    %v529 = vsel %vm528, %v521, %v525
    %v530 = vand.u32 2147483647, %v499
    %vm531 = vcmp.eq.f32.partialorder %v530, 8.507059e+37
    %v532 = vand.u32 %v499, 2147483648
    %v533 = vor.u32 1.1754944e-38, %v532
    %v534 = vsel %vm531, %v533, %v529
    %v535 = vmul.f32 1.0, %v534
    %v536 = vrcp.pop %v502
    %v537 = vmul.f32 %v502, %v536
    %v538 = vsub.f32 1.0, %v537
    %v539 = vmul.f32 %v536, %v538
    %v540 = vadd.f32 %v536, %v539
    %vm541 = vweird.f32 %v502
    %vm542 = vweird.f32 %v536
    %vm543 = vmor %vm541, %vm542
    %v544 = vsel %vm543, %v536, %v540
    %v545 = vand.u32 2147483647, %v502
    %vm546 = vcmp.eq.f32.partialorder %v545, 8.507059e+37
    %v547 = vand.u32 %v502, 2147483648
    %v548 = vor.u32 1.1754944e-38, %v547
    %v549 = vsel %vm546, %v548, %v544
    %v550 = vmul.f32 1.0, %v549
    %v551 = vrcp.pop %v505
    %v552 = vmul.f32 %v505, %v551
    %v553 = vsub.f32 1.0, %v552
    %v554 = vmul.f32 %v551, %v553
    %v555 = vadd.f32 %v551, %v554
    %vm556 = vweird.f32 %v505
    %vm557 = vweird.f32 %v551
    %vm558 = vmor %vm556, %vm557
    %v559 = vsel %vm558, %v551, %v555
    %v560 = vand.u32 2147483647, %v505
    %vm561 = vcmp.eq.f32.partialorder %v560, 8.507059e+37
    %v562 = vand.u32 %v505, 2147483648
    %v563 = vor.u32 1.1754944e-38, %v562
    %v564 = vsel %vm561, %v563, %v559
    %v565 = vmul.f32 1.0, %v564
    %v566 = vrcp.pop %v508
    %v567 = vmul.f32 %v508, %v566
    %v568 = vsub.f32 1.0, %v567
    %v569 = vmul.f32 %v566, %v568
    %v570 = vadd.f32 %v566, %v569
    %vm571 = vweird.f32 %v508
    %vm572 = vweird.f32 %v566
    %vm573 = vmor %vm571, %vm572
    %v574 = vsel %vm573, %v566, %v570
    %v575 = vand.u32 2147483647, %v508
    %vm576 = vcmp.eq.f32.partialorder %v575, 8.507059e+37
    %v577 = vand.u32 %v508, 2147483648
    %v578 = vor.u32 1.1754944e-38, %v577
    %v579 = vsel %vm576, %v578, %v574
    %v580 = vmul.f32 1.0, %v579
    %v581 = vrcp.pop %v511
    %v582 = vmul.f32 %v511, %v581
    %v583 = vsub.f32 1.0, %v582
    %v584 = vmul.f32 %v581, %v583
    %v585 = vadd.f32 %v581, %v584
    %vm586 = vweird.f32 %v511
    %vm587 = vweird.f32 %v581
    %vm588 = vmor %vm586, %vm587
    %v589 = vsel %vm588, %v581, %v585
    %v590 = vand.u32 2147483647, %v511
    %vm591 = vcmp.eq.f32.partialorder %v590, 8.507059e+37
    %v592 = vand.u32 %v511, 2147483648
    %v593 = vor.u32 1.1754944e-38, %v592
    %v594 = vsel %vm591, %v593, %v589
    %v595 = vmul.f32 1.0, %v594
    %v596 = vrcp.pop %v514
    %v597 = vmul.f32 %v514, %v596
    %v598 = vsub.f32 1.0, %v597
    %v599 = vmul.f32 %v596, %v598
    %v600 = vadd.f32 %v596, %v599
    %vm601 = vweird.f32 %v514
    %vm602 = vweird.f32 %v596
    %vm603 = vmor %vm601, %vm602
    %v604 = vsel %vm603, %v596, %v600
    %v605 = vand.u32 2147483647, %v514
    %vm606 = vcmp.eq.f32.partialorder %v605, 8.507059e+37
    %v607 = vand.u32 %v514, 2147483648
    %v608 = vor.u32 1.1754944e-38, %v607
    %v609 = vsel %vm606, %v608, %v604
    %v610 = vmul.f32 1.0, %v609
    %v611 = vrcp.pop %v517
    %v612 = vmul.f32 %v517, %v611
    %v613 = vsub.f32 1.0, %v612
    %v614 = vmul.f32 %v611, %v613
    %v615 = vadd.f32 %v611, %v614
    %vm616 = vweird.f32 %v517
    %vm617 = vweird.f32 %v611
    %vm618 = vmor %vm616, %vm617
    %v619 = vsel %vm618, %v611, %v615
    %v620 = vand.u32 2147483647, %v517
    %vm621 = vcmp.eq.f32.partialorder %v620, 8.507059e+37
    %v622 = vand.u32 %v517, 2147483648
    %v623 = vor.u32 1.1754944e-38, %v622
    %v624 = vsel %vm621, %v623, %v619
    %v625 = vmul.f32 1.0, %v624
    %v626 = vrcp.pop %v520
    %v627 = vmul.f32 %v520, %v626
    %v628 = vsub.f32 1.0, %v627
    %v629 = vmul.f32 %v626, %v628
    %v630 = vadd.f32 %v626, %v629
    %vm631 = vweird.f32 %v520
    %vm632 = vweird.f32 %v626
    %vm633 = vmor %vm631, %vm632
    %v634 = vsel %vm633, %v626, %v630
    %v635 = vand.u32 2147483647, %v520
    %vm636 = vcmp.eq.f32.partialorder %v635, 8.507059e+37
    %v637 = vand.u32 %v520, 2147483648
    %v638 = vor.u32 1.1754944e-38, %v637
    %v639 = vsel %vm636, %v638, %v634
    %v640 = vmul.f32 1.0, %v639
    %v641 = vmul.f32 %v482, %v535
    %v642 = vmul.f32 %v484, %v550
    %v643 = vmul.f32 %v486, %v565
    %v644 = vmul.f32 %v488, %v580
    %v645 = vmul.f32 %v490, %v595
    %v646 = vmul.f32 %v492, %v610
    %v647 = vmul.f32 %v494, %v625
    %v648 = vmul.f32 %v496, %v640
    %649 = vrot.lane.b32.xlu0 %v197, 64
    %v650 = vpop.permute.xlu0 %649
    %v653 = vsel %vm242, %v641, 0
    %655 = vmatpush.msra.mxu0 0.0
    %656 = vmatpush.msra.mxu0 0.0
    %657 = vmatpush.msra.mxu0 0.0
    %658 = vmatpush.msra.mxu0 0.0
    %659 = vmatpush.msra.mxu0 0.0
    %660 = vmatpush.msra.mxu0 0.0
    %661 = vmatpush.msra.mxu0 0.0
    %662 = vmatpush.msra.mxu0 0.0
    %663 = vmatpush.msra.mxu0 0.0
    %664 = vmatpush.msra.mxu0 0.0
    %665 = vmatpush.msra.mxu0 0.0
    %666 = vmatpush.msra.mxu0 0.0
    %667 = vmatpush.msra.mxu0 0.0
    %668 = vmatpush.msra.mxu0 0.0
    %669 = vmatpush.msra.mxu0 0.0
    %670 = vmatpush.msra.mxu0 %v650
    %671 = vmatmul.f32.gmra.mxu0 %v653
    %v672 = vpop.f32.mrf.mxu0
    %v673 = vadd.f32 0.0, %v672
    %674 = vdwg.mxu0
    %675 = vrot.lane.b32.xlu0 %v200, 64
    %v676 = vpop.permute.xlu0 %675
    %v679 = vsel %vm242, %v642, 0
    %681 = vmatpush.msra.mxu0 0.0
    %682 = vmatpush.msra.mxu0 0.0
    %683 = vmatpush.msra.mxu0 0.0
    %684 = vmatpush.msra.mxu0 0.0
    %685 = vmatpush.msra.mxu0 0.0
    %686 = vmatpush.msra.mxu0 0.0
    %687 = vmatpush.msra.mxu0 0.0
    %688 = vmatpush.msra.mxu0 0.0
    %689 = vmatpush.msra.mxu0 0.0
    %690 = vmatpush.msra.mxu0 0.0
    %691 = vmatpush.msra.mxu0 0.0
    %692 = vmatpush.msra.mxu0 0.0
    %693 = vmatpush.msra.mxu0 0.0
    %694 = vmatpush.msra.mxu0 0.0
    %695 = vmatpush.msra.mxu0 0.0
    %696 = vmatpush.msra.mxu0 %v676
    %697 = vmatmul.f32.gmra.mxu0 %v679
    %v698 = vpop.f32.mrf.mxu0
    %v699 = vadd.f32 0.0, %v698
    %700 = vdwg.mxu0
    %701 = vrot.lane.b32.xlu0 %v205, 64
    %v702 = vpop.permute.xlu0 %701
    %v705 = vsel %vm242, %v643, 0
    %707 = vmatpush.msra.mxu0 0.0
    %708 = vmatpush.msra.mxu0 0.0
    %709 = vmatpush.msra.mxu0 0.0
    %710 = vmatpush.msra.mxu0 0.0
    %711 = vmatpush.msra.mxu0 0.0
    %712 = vmatpush.msra.mxu0 0.0
    %713 = vmatpush.msra.mxu0 0.0
    %714 = vmatpush.msra.mxu0 0.0
    %715 = vmatpush.msra.mxu0 0.0
    %716 = vmatpush.msra.mxu0 0.0
    %717 = vmatpush.msra.mxu0 0.0
    %718 = vmatpush.msra.mxu0 0.0
    %719 = vmatpush.msra.mxu0 0.0
    %720 = vmatpush.msra.mxu0 0.0
    %721 = vmatpush.msra.mxu0 0.0
    %722 = vmatpush.msra.mxu0 %v702
    %723 = vmatmul.f32.gmra.mxu0 %v705
    %v724 = vpop.f32.mrf.mxu0
    %v725 = vadd.f32 0.0, %v724
    %726 = vdwg.mxu0
    %727 = vrot.lane.b32.xlu0 %v207, 64
    %v728 = vpop.permute.xlu0 %727
    %v731 = vsel %vm242, %v644, 0
    %733 = vmatpush.msra.mxu0 0.0
    %734 = vmatpush.msra.mxu0 0.0
    %735 = vmatpush.msra.mxu0 0.0
    %736 = vmatpush.msra.mxu0 0.0
    %737 = vmatpush.msra.mxu0 0.0
    %738 = vmatpush.msra.mxu0 0.0
    %739 = vmatpush.msra.mxu0 0.0
    %740 = vmatpush.msra.mxu0 0.0
    %741 = vmatpush.msra.mxu0 0.0
    %742 = vmatpush.msra.mxu0 0.0
    %743 = vmatpush.msra.mxu0 0.0
    %744 = vmatpush.msra.mxu0 0.0
    %745 = vmatpush.msra.mxu0 0.0
    %746 = vmatpush.msra.mxu0 0.0
    %747 = vmatpush.msra.mxu0 0.0
    %748 = vmatpush.msra.mxu0 %v728
    %749 = vmatmul.f32.gmra.mxu0 %v731
    %v750 = vpop.f32.mrf.mxu0
    %v751 = vadd.f32 0.0, %v750
    %752 = vdwg.mxu0
    %753 = vrot.lane.b32.xlu0 %v209, 64
    %v754 = vpop.permute.xlu0 %753
    %v757 = vsel %vm242, %v645, 0
    %759 = vmatpush.msra.mxu0 0.0
    %760 = vmatpush.msra.mxu0 0.0
    %761 = vmatpush.msra.mxu0 0.0
    %762 = vmatpush.msra.mxu0 0.0
    %763 = vmatpush.msra.mxu0 0.0
    %764 = vmatpush.msra.mxu0 0.0
    %765 = vmatpush.msra.mxu0 0.0
    %766 = vmatpush.msra.mxu0 0.0
    %767 = vmatpush.msra.mxu0 0.0
    %768 = vmatpush.msra.mxu0 0.0
    %769 = vmatpush.msra.mxu0 0.0
    %770 = vmatpush.msra.mxu0 0.0
    %771 = vmatpush.msra.mxu0 0.0
    %772 = vmatpush.msra.mxu0 0.0
    %773 = vmatpush.msra.mxu0 0.0
    %774 = vmatpush.msra.mxu0 %v754
    %775 = vmatmul.f32.gmra.mxu0 %v757
    %v776 = vpop.f32.mrf.mxu0
    %v777 = vadd.f32 0.0, %v776
    %778 = vdwg.mxu0
    %779 = vrot.lane.b32.xlu0 %v211, 64
    %v780 = vpop.permute.xlu0 %779
    %v783 = vsel %vm242, %v646, 0
    %785 = vmatpush.msra.mxu0 0.0
    %786 = vmatpush.msra.mxu0 0.0
    %787 = vmatpush.msra.mxu0 0.0
    %788 = vmatpush.msra.mxu0 0.0
    %789 = vmatpush.msra.mxu0 0.0
    %790 = vmatpush.msra.mxu0 0.0
    %791 = vmatpush.msra.mxu0 0.0
    %792 = vmatpush.msra.mxu0 0.0
    %793 = vmatpush.msra.mxu0 0.0
    %794 = vmatpush.msra.mxu0 0.0
    %795 = vmatpush.msra.mxu0 0.0
    %796 = vmatpush.msra.mxu0 0.0
    %797 = vmatpush.msra.mxu0 0.0
    %798 = vmatpush.msra.mxu0 0.0
    %799 = vmatpush.msra.mxu0 0.0
    %800 = vmatpush.msra.mxu0 %v780
    %801 = vmatmul.f32.gmra.mxu0 %v783
    %v802 = vpop.f32.mrf.mxu0
    %v803 = vadd.f32 0.0, %v802
    %804 = vdwg.mxu0
    %805 = vrot.lane.b32.xlu0 %v213, 64
    %v806 = vpop.permute.xlu0 %805
    %v809 = vsel %vm242, %v647, 0
    %811 = vmatpush.msra.mxu0 0.0
    %812 = vmatpush.msra.mxu0 0.0
    %813 = vmatpush.msra.mxu0 0.0
    %814 = vmatpush.msra.mxu0 0.0
    %815 = vmatpush.msra.mxu0 0.0
    %816 = vmatpush.msra.mxu0 0.0
    %817 = vmatpush.msra.mxu0 0.0
    %818 = vmatpush.msra.mxu0 0.0
    %819 = vmatpush.msra.mxu0 0.0
    %820 = vmatpush.msra.mxu0 0.0
    %821 = vmatpush.msra.mxu0 0.0
    %822 = vmatpush.msra.mxu0 0.0
    %823 = vmatpush.msra.mxu0 0.0
    %824 = vmatpush.msra.mxu0 0.0
    %825 = vmatpush.msra.mxu0 0.0
    %826 = vmatpush.msra.mxu0 %v806
    %827 = vmatmul.f32.gmra.mxu0 %v809
    %v828 = vpop.f32.mrf.mxu0
    %v829 = vadd.f32 0.0, %v828
    %830 = vdwg.mxu0
    %831 = vrot.lane.b32.xlu0 %v215, 64
    %v832 = vpop.permute.xlu0 %831
    %v835 = vsel %vm242, %v648, 0
    %837 = vmatpush.msra.mxu0 0.0
    %838 = vmatpush.msra.mxu0 0.0
    %839 = vmatpush.msra.mxu0 0.0
    %840 = vmatpush.msra.mxu0 0.0
    %841 = vmatpush.msra.mxu0 0.0
    %842 = vmatpush.msra.mxu0 0.0
    %843 = vmatpush.msra.mxu0 0.0
    %844 = vmatpush.msra.mxu0 0.0
    %845 = vmatpush.msra.mxu0 0.0
    %846 = vmatpush.msra.mxu0 0.0
    %847 = vmatpush.msra.mxu0 0.0
    %848 = vmatpush.msra.mxu0 0.0
    %849 = vmatpush.msra.mxu0 0.0
    %850 = vmatpush.msra.mxu0 0.0
    %851 = vmatpush.msra.mxu0 0.0
    %852 = vmatpush.msra.mxu0 %v832
    %853 = vmatmul.f32.gmra.mxu0 %v835
    %v854 = vpop.f32.mrf.mxu0
    %v855 = vadd.f32 0.0, %v854
    %856 = vdwg.mxu0
    %v857 = vld [vmem:[%s6] sm:$0xff]
    %v858 = vld [vmem:[%s6 + $0x8] sm:$0xff]
    %v859 = vld [vmem:[%s6 + $0x10] sm:$0xff]
    %v860 = vld [vmem:[%s6 + $0x18] sm:$0xff]
    %v861 = vld [vmem:[%s6 + $0x20] sm:$0xff]
    %v862 = vld [vmem:[%s6 + $0x28] sm:$0xff]
    %v863 = vld [vmem:[%s6 + $0x30] sm:$0xff]
    %v864 = vld [vmem:[%s6 + $0x38] sm:$0xff]
    %v866 = vsel %vm242, %v673, 0
    %868 = vmatpush.msra.mxu0 0.0
    %869 = vmatpush.msra.mxu0 0.0
    %870 = vmatpush.msra.mxu0 0.0
    %871 = vmatpush.msra.mxu0 0.0
    %872 = vmatpush.msra.mxu0 0.0
    %873 = vmatpush.msra.mxu0 0.0
    %874 = vmatpush.msra.mxu0 0.0
    %875 = vmatpush.msra.mxu0 0.0
    %876 = vmatpush.msra.mxu0 0.0
    %877 = vmatpush.msra.mxu0 0.0
    %878 = vmatpush.msra.mxu0 0.0
    %879 = vmatpush.msra.mxu0 0.0
    %880 = vmatpush.msra.mxu0 0.0
    %881 = vmatpush.msra.mxu0 0.0
    %882 = vmatpush.msra.mxu0 0.0
    %883 = vmatpush.msra.mxu0 %v857
    %884 = vmatmul.f32.gmra.mxu0 %v866
    %v885 = vpop.f32.mrf.mxu0
    %v886 = vadd.f32 0.0, %v885
    %887 = vdwg.mxu0
    %v889 = vsel %vm242, %v699, 0
    %891 = vmatpush.msra.mxu0 0.0
    %892 = vmatpush.msra.mxu0 0.0
    %893 = vmatpush.msra.mxu0 0.0
    %894 = vmatpush.msra.mxu0 0.0
    %895 = vmatpush.msra.mxu0 0.0
    %896 = vmatpush.msra.mxu0 0.0
    %897 = vmatpush.msra.mxu0 0.0
    %898 = vmatpush.msra.mxu0 0.0
    %899 = vmatpush.msra.mxu0 0.0
    %900 = vmatpush.msra.mxu0 0.0
    %901 = vmatpush.msra.mxu0 0.0
    %902 = vmatpush.msra.mxu0 0.0
    %903 = vmatpush.msra.mxu0 0.0
    %904 = vmatpush.msra.mxu0 0.0
    %905 = vmatpush.msra.mxu0 0.0
    %906 = vmatpush.msra.mxu0 %v858
    %907 = vmatmul.f32.gmra.mxu0 %v889
    %v908 = vpop.f32.mrf.mxu0
    %v909 = vadd.f32 0.0, %v908
    %910 = vdwg.mxu0
    %v912 = vsel %vm242, %v725, 0
    %914 = vmatpush.msra.mxu0 0.0
    %915 = vmatpush.msra.mxu0 0.0
    %916 = vmatpush.msra.mxu0 0.0
    %917 = vmatpush.msra.mxu0 0.0
    %918 = vmatpush.msra.mxu0 0.0
    %919 = vmatpush.msra.mxu0 0.0
    %920 = vmatpush.msra.mxu0 0.0
    %921 = vmatpush.msra.mxu0 0.0
    %922 = vmatpush.msra.mxu0 0.0
    %923 = vmatpush.msra.mxu0 0.0
    %924 = vmatpush.msra.mxu0 0.0
    %925 = vmatpush.msra.mxu0 0.0
    %926 = vmatpush.msra.mxu0 0.0
    %927 = vmatpush.msra.mxu0 0.0
    %928 = vmatpush.msra.mxu0 0.0
    %929 = vmatpush.msra.mxu0 %v859
    %930 = vmatmul.f32.gmra.mxu0 %v912
    %v931 = vpop.f32.mrf.mxu0
    %v932 = vadd.f32 0.0, %v931
    %933 = vdwg.mxu0
    %v935 = vsel %vm242, %v751, 0
    %937 = vmatpush.msra.mxu0 0.0
    %938 = vmatpush.msra.mxu0 0.0
    %939 = vmatpush.msra.mxu0 0.0
    %940 = vmatpush.msra.mxu0 0.0
    %941 = vmatpush.msra.mxu0 0.0
    %942 = vmatpush.msra.mxu0 0.0
    %943 = vmatpush.msra.mxu0 0.0
    %944 = vmatpush.msra.mxu0 0.0
    %945 = vmatpush.msra.mxu0 0.0
    %946 = vmatpush.msra.mxu0 0.0
    %947 = vmatpush.msra.mxu0 0.0
    %948 = vmatpush.msra.mxu0 0.0
    %949 = vmatpush.msra.mxu0 0.0
    %950 = vmatpush.msra.mxu0 0.0
    %951 = vmatpush.msra.mxu0 0.0
    %952 = vmatpush.msra.mxu0 %v860
    %953 = vmatmul.f32.gmra.mxu0 %v935
    %v954 = vpop.f32.mrf.mxu0
    %v955 = vadd.f32 0.0, %v954
    %956 = vdwg.mxu0
    %v958 = vsel %vm242, %v777, 0
    %960 = vmatpush.msra.mxu0 0.0
    %961 = vmatpush.msra.mxu0 0.0
    %962 = vmatpush.msra.mxu0 0.0
    %963 = vmatpush.msra.mxu0 0.0
    %964 = vmatpush.msra.mxu0 0.0
    %965 = vmatpush.msra.mxu0 0.0
    %966 = vmatpush.msra.mxu0 0.0
    %967 = vmatpush.msra.mxu0 0.0
    %968 = vmatpush.msra.mxu0 0.0
    %969 = vmatpush.msra.mxu0 0.0
    %970 = vmatpush.msra.mxu0 0.0
    %971 = vmatpush.msra.mxu0 0.0
    %972 = vmatpush.msra.mxu0 0.0
    %973 = vmatpush.msra.mxu0 0.0
    %974 = vmatpush.msra.mxu0 0.0
    %975 = vmatpush.msra.mxu0 %v861
    %976 = vmatmul.f32.gmra.mxu0 %v958
    %v977 = vpop.f32.mrf.mxu0
    %v978 = vadd.f32 0.0, %v977
    %979 = vdwg.mxu0
    %v981 = vsel %vm242, %v803, 0
    %983 = vmatpush.msra.mxu0 0.0
    %984 = vmatpush.msra.mxu0 0.0
    %985 = vmatpush.msra.mxu0 0.0
    %986 = vmatpush.msra.mxu0 0.0
    %987 = vmatpush.msra.mxu0 0.0
    %988 = vmatpush.msra.mxu0 0.0
    %989 = vmatpush.msra.mxu0 0.0
    %990 = vmatpush.msra.mxu0 0.0
    %991 = vmatpush.msra.mxu0 0.0
    %992 = vmatpush.msra.mxu0 0.0
    %993 = vmatpush.msra.mxu0 0.0
    %994 = vmatpush.msra.mxu0 0.0
    %995 = vmatpush.msra.mxu0 0.0
    %996 = vmatpush.msra.mxu0 0.0
    %997 = vmatpush.msra.mxu0 0.0
    %998 = vmatpush.msra.mxu0 %v862
    %999 = vmatmul.f32.gmra.mxu0 %v981
    %v1000 = vpop.f32.mrf.mxu0
    %v1001 = vadd.f32 0.0, %v1000
    %1002 = vdwg.mxu0
    %v1004 = vsel %vm242, %v829, 0
    %1006 = vmatpush.msra.mxu0 0.0
    %1007 = vmatpush.msra.mxu0 0.0
    %1008 = vmatpush.msra.mxu0 0.0
    %1009 = vmatpush.msra.mxu0 0.0
    %1010 = vmatpush.msra.mxu0 0.0
    %1011 = vmatpush.msra.mxu0 0.0
    %1012 = vmatpush.msra.mxu0 0.0
    %1013 = vmatpush.msra.mxu0 0.0
    %1014 = vmatpush.msra.mxu0 0.0
    %1015 = vmatpush.msra.mxu0 0.0
    %1016 = vmatpush.msra.mxu0 0.0
    %1017 = vmatpush.msra.mxu0 0.0
    %1018 = vmatpush.msra.mxu0 0.0
    %1019 = vmatpush.msra.mxu0 0.0
    %1020 = vmatpush.msra.mxu0 0.0
    %1021 = vmatpush.msra.mxu0 %v863
    %1022 = vmatmul.f32.gmra.mxu0 %v1004
    %v1023 = vpop.f32.mrf.mxu0
    %v1024 = vadd.f32 0.0, %v1023
    %1025 = vdwg.mxu0
    %v1027 = vsel %vm242, %v855, 0
    %1029 = vmatpush.msra.mxu0 0.0
    %1030 = vmatpush.msra.mxu0 0.0
    %1031 = vmatpush.msra.mxu0 0.0
    %1032 = vmatpush.msra.mxu0 0.0
    %1033 = vmatpush.msra.mxu0 0.0
    %1034 = vmatpush.msra.mxu0 0.0
    %1035 = vmatpush.msra.mxu0 0.0
    %1036 = vmatpush.msra.mxu0 0.0
    %1037 = vmatpush.msra.mxu0 0.0
    %1038 = vmatpush.msra.mxu0 0.0
    %1039 = vmatpush.msra.mxu0 0.0
    %1040 = vmatpush.msra.mxu0 0.0
    %1041 = vmatpush.msra.mxu0 0.0
    %1042 = vmatpush.msra.mxu0 0.0
    %1043 = vmatpush.msra.mxu0 0.0
    %1044 = vmatpush.msra.mxu0 %v864
    %1045 = vmatmul.f32.gmra.mxu0 %v1027
    %v1046 = vpop.f32.mrf.mxu0
    %v1047 = vadd.f32 0.0, %v1046
    %1048 = vdwg.mxu0
    %v1049 = vsel %vm76, %v886, 0.0
    %v1050 = vsel %vm76, %v932, 0.0
    %v1051 = vadd.f32 %v1049, %v1050
    %v1052 = vsel %vm76, %v978, 0.0
    %v1053 = vadd.f32 %v1051, %v1052
    %v1054 = vsel %vm76, %v1024, 0.0
    %v1055 = vadd.f32 %v1053, %v1054
    %v1056 = vsel %vm76, %v909, 0.0
    %v1057 = vsel %vm76, %v955, 0.0
    %v1058 = vadd.f32 %v1056, %v1057
    %v1059 = vsel %vm76, %v1001, 0.0
    %v1060 = vadd.f32 %v1058, %v1059
    %v1061 = vsel %vm76, %v1047, 0.0
    %v1062 = vadd.f32 %v1060, %v1061
    %v1063 = vld [vmem:[%s7] sm:$0x1]
    %v1065 = vperm.slane %v1063, 0
    %v1067 = vadd.f32 %v1055, %v1065
    %v1068 = vadd.f32 %v1062, %v1065
    %v1069 = vadd.f32 %v64, %v1067
    %v1070 = vadd.f32 %v65, %v1068
    %v1071 = vld [vmem:[%s8] sm:$0x1]
    %v1072 = vld [vmem:[%s9] sm:$0x1]
    %v1073 = vsel %vm76, %v1069, 0.0
    %1074 = vadd.xlane.f32.xlu0 %v1073
    %v1075 = vpop.xlane.xlu0 %1074
    %v1076 = vsel %vm76, %v1070, 0.0
    %1077 = vadd.xlane.f32.xlu0 %v1076
    %v1078 = vpop.xlane.xlu0 %1077
    %v1079 = vmul.f32 %v1075, 0.03125
    %v1080 = vmul.f32 %v1078, 0.03125
    %v1081 = vsub.f32 %v1069, %v1079
    %v1082 = vsub.f32 %v1070, %v1080
    %v1083 = vmul.f32 %v1081, %v1081
    %v1084 = vmul.f32 %v1082, %v1082
    %v1085 = vsel %vm76, %v1083, 0.0
    %1086 = vadd.xlane.f32.xlu0 %v1085
    %v1087 = vpop.xlane.xlu0 %1086
    %v1088 = vsel %vm76, %v1084, 0.0
    %1089 = vadd.xlane.f32.xlu0 %v1088
    %v1090 = vpop.xlane.xlu0 %1089
    %v1091 = vmul.f32 %v1087, 0.032258064
    %v1092 = vmul.f32 %v1090, 0.032258064
    %v1093 = vrsqrt.pop %v1091
    %v1094 = vmul.f32 %v1093, %v1091
    %v1095 = vmul.f32 %v1094, %v1093
    %v1096 = vmul.f32 0.5, %v1095
    %v1097 = vsub.f32 1.5, %v1096
    %v1098 = vmul.f32 %v1093, %v1097
    %v1099 = vmul.f32 %v1091, %v1098
    %vm1100 = vcmp.eq.f32.partialorder %v1091, inf
    %v1101 = vsel %vm1100, %v1091, %v1099
    %vm1102 = vcmp.eq.f32.partialorder %v1091, 0.0
    %v1103 = vand.u32 %v1091, 2147483648
    %v1104 = vsel %vm1102, %v1103, %v1101
    %v1105 = vrsqrt.pop %v1092
    %v1106 = vmul.f32 %v1105, %v1092
    %v1107 = vmul.f32 %v1106, %v1105
    %v1108 = vmul.f32 0.5, %v1107
    %v1109 = vsub.f32 1.5, %v1108
    %v1110 = vmul.f32 %v1105, %v1109
    %v1111 = vmul.f32 %v1092, %v1110
    %vm1112 = vcmp.eq.f32.partialorder %v1092, inf
    %v1113 = vsel %vm1112, %v1092, %v1111
    %vm1114 = vcmp.eq.f32.partialorder %v1092, 0.0
    %v1115 = vand.u32 %v1092, 2147483648
    %v1116 = vsel %vm1114, %v1115, %v1113
    %v1117 = vadd.f32 %v1104, 1e-06
    %v1118 = vadd.f32 %v1116, 1e-06
    %v1119 = vrcp.pop %v1117
    %v1120 = vmul.f32 %v1117, %v1119
    %v1121 = vsub.f32 1.0, %v1120
    %v1122 = vmul.f32 %v1119, %v1121
    %v1123 = vadd.f32 %v1119, %v1122
    %vm1124 = vweird.f32 %v1117
    %vm1125 = vweird.f32 %v1119
    %vm1126 = vmor %vm1124, %vm1125
    %v1127 = vsel %vm1126, %v1119, %v1123
    %v1128 = vand.u32 2147483647, %v1117
    %vm1129 = vcmp.eq.f32.partialorder %v1128, 8.507059e+37
    %v1130 = vand.u32 %v1117, 2147483648
    %v1131 = vor.u32 1.1754944e-38, %v1130
    %v1132 = vsel %vm1129, %v1131, %v1127
    %v1133 = vmul.f32 1.0, %v1132
    %v1134 = vrcp.pop %v1118
    %v1135 = vmul.f32 %v1118, %v1134
    %v1136 = vsub.f32 1.0, %v1135
    %v1137 = vmul.f32 %v1134, %v1136
    %v1138 = vadd.f32 %v1134, %v1137
    %vm1139 = vweird.f32 %v1118
    %vm1140 = vweird.f32 %v1134
    %vm1141 = vmor %vm1139, %vm1140
    %v1142 = vsel %vm1141, %v1134, %v1138
    %v1143 = vand.u32 2147483647, %v1118
    %vm1144 = vcmp.eq.f32.partialorder %v1143, 8.507059e+37
    %v1145 = vand.u32 %v1118, 2147483648
    %v1146 = vor.u32 1.1754944e-38, %v1145
    %v1147 = vsel %vm1144, %v1146, %v1142
    %v1148 = vmul.f32 1.0, %v1147
    %v1149 = vmul.f32 %v1081, %v1133
    %v1150 = vmul.f32 %v1082, %v1148
    %v1152 = vperm.slane %v1071, 0
    %v1154 = vmul.f32 %v1152, %v1149
    %v1155 = vmul.f32 %v1152, %v1150
    %v1157 = vperm.slane %v1072, 0
    %v1159 = vadd.f32 %v1154, %v1157
    %v1160 = vadd.f32 %v1155, %v1157
    %v1161 = vld [vmem:[#allocation2] sm:$0xff]
    %v1162 = vld [vmem:[#allocation2 + $0x8] sm:$0xff]
    %v1163 = vld [vmem:[#allocation2 + $0x10] sm:$0xff]
    %v1164 = vld [vmem:[#allocation2 + $0x18] sm:$0xff]
    %v1165 = vld [vmem:[%s11] sm:$0x1]
    %v1167 = vperm.slane %v1165, 0
    %v1170 = vsel %vm76, %v1159, 0
    %v1173 = vsel %vm76, %v1160, 0
    %1175 = vmatpush.msra.mxu0 0.0
    %1176 = vmatpush.msra.mxu0 0.0
    %1177 = vmatpush.msra.mxu0 0.0
    %1178 = vmatpush.msra.mxu0 0.0
    %1179 = vmatpush.msra.mxu0 0.0
    %1180 = vmatpush.msra.mxu0 0.0
    %1181 = vmatpush.msra.mxu0 0.0
    %1182 = vmatpush.msra.mxu0 0.0
    %1183 = vmatpush.msra.mxu0 0.0
    %1184 = vmatpush.msra.mxu0 0.0
    %1185 = vmatpush.msra.mxu0 0.0
    %1186 = vmatpush.msra.mxu0 0.0
    %1187 = vmatpush.msra.mxu0 %v1164
    %1188 = vmatpush.msra.mxu0 %v1163
    %1189 = vmatpush.msra.mxu0 %v1162
    %1190 = vmatpush.msra.mxu0 %v1161
    %1191 = vmatmul.f32.gmra.mxu0 %v1170
    %v1192 = vpop.f32.mrf.mxu0
    %v1193 = vadd.f32 %v1167, %v1192
    %1194 = vmatmul.f32.gmra.mxu0 %v1173
    %v1195 = vpop.f32.mrf.mxu0
    %v1196 = vadd.f32 %v1167, %v1195
    %1197 = vdwg.mxu0
    %v1198 = vmax.f32 %v1193, 0.0
    %v1199 = vmax.f32 %v1196, 0.0
    %v1200 = vld [vmem:[%s12] sm:$0xff]
    %v1201 = vld [vmem:[%s12 + $0x8] sm:$0xff]
    %v1202 = vld [vmem:[%s12 + $0x10] sm:$0xff]
    %v1203 = vld [vmem:[%s12 + $0x18] sm:$0xff]
    %v1204 = vld [vmem:[%s12 + $0x20] sm:$0xff]
    %v1205 = vld [vmem:[%s12 + $0x28] sm:$0xff]
    %v1206 = vld [vmem:[%s12 + $0x30] sm:$0xff]
    %v1207 = vld [vmem:[%s12 + $0x38] sm:$0xff]
    %v1208 = vld [vmem:[%s13] sm:$0x1]
    %v1210 = vperm.slane %v1208, 0
    %vm1212 = vcmask 523264
    %v1214 = vsel %vm1212, %v1198, 0
    %v1217 = vsel %vm1212, %v1199, 0
    %1219 = vmatpush.msra.mxu0 0.0
    %1220 = vmatpush.msra.mxu0 0.0
    %1221 = vmatpush.msra.mxu0 0.0
    %1222 = vmatpush.msra.mxu0 0.0
    %1223 = vmatpush.msra.mxu0 0.0
    %1224 = vmatpush.msra.mxu0 0.0
    %1225 = vmatpush.msra.mxu0 0.0
    %1226 = vmatpush.msra.mxu0 0.0
    %1227 = vmatpush.msra.mxu0 %v1207
    %1228 = vmatpush.msra.mxu0 %v1206
    %1229 = vmatpush.msra.mxu0 %v1205
    %1230 = vmatpush.msra.mxu0 %v1204
    %1231 = vmatpush.msra.mxu0 %v1203
    %1232 = vmatpush.msra.mxu0 %v1202
    %1233 = vmatpush.msra.mxu0 %v1201
    %1234 = vmatpush.msra.mxu0 %v1200
    %1235 = vmatmul.f32.gmra.mxu0 %v1214
    %v1236 = vpop.f32.mrf.mxu0
    %v1237 = vadd.f32 %v1210, %v1236
    %1238 = vmatmul.f32.gmra.mxu0 %v1217
    %v1239 = vpop.f32.mrf.mxu0
    %v1240 = vadd.f32 %v1210, %v1239
    %1241 = vdwg.mxu0
    %v1242 = vadd.f32 %v1069, %v1237
    %v1243 = vadd.f32 %v1070, %v1240
    %1244 = vst.msk [vmem:[#allocation5] sm:$0xff] %vm76, %v1242
    %1245 = vst.msk [vmem:[#allocation5 + $0x8] sm:$0xff] %vm76, %v1243
    // Predicated region
    $region62: #{encoder_layer.1} parent=1 // pred_check
      _
    $region63: #{encoder_layer.1} parent=1 // pred_check_branch
      %1247 = sbr.rel (0) target = $region65
    $region64: #{encoder_layer.1} parent=1 // pred_region
      %1249 = vsyncadd [#allocation4], 0
      %s1250 = sshll.u32 [#allocation5], 4
      %s1251 = int_to_ptr.vmem [resolvable:$true] %s1250
      %s1252 = sshll.u32 %s14, 4
      %s1253 = int_to_ptr.hbm [resolvable:$true] %s1252
      %1258 = dma.vmem_to_hbm [thread:$0]  %s1251, 256, %s1253, [#allocation4], 128, 128, 8
    $region65: #{encoder_layer.1} parent=1 // pred_fallthru
      _
    // Predicated region
    $region66: #{encoder_layer.1} parent=1 // pred_check
      _
    $region67: #{encoder_layer.1} parent=1 // pred_check_branch
      %1260 = sbr.rel (0) target = $region69
    $region68: #{encoder_layer.1} parent=1 // pred_region
      %1262 = dma.done [#allocation4], 256
    $region69: #{encoder_layer.1} parent=1 // pred_fallthru
      _
    %1263 = vsyncpa [#allocation3], 1
    %1264 = vsyncpa [#allocation4], 1

</llo_original>
